<compile_context>
chip_gen: v6e
topology: v6e:2x2x1
jax: 0.10.0
libtpu: 0.0.40
codegen_flags: <defaults>
</compile_context>

<pallas_src>
import functools

import jax
import jax.numpy as jnp
from jax.experimental import pallas as pl
from jax.experimental.pallas import tpu as pltpu


def moe_kernel(x_ref, w1f_ref, b1f_ref, w2f_ref, b2f_ref, seg_ref, fold_ref,
               o_ref):
    EO = fold_ref.shape[0]                            # E * O

    # ---- layer 1: gating hidden + all expert hiddens, one MXU matmul + ReLU ----
    h = jnp.maximum(
        jnp.dot(x_ref[...], w1f_ref[...], preferred_element_type=jnp.float32)
        + b1f_ref[...], 0.0)                          # (tb, GH + E*H)

    # ---- layer 2: [gating logits (O-replicated) | expert logits], one matmul ----
    z = (jnp.dot(h, w2f_ref[...], preferred_element_type=jnp.float32)
         + b2f_ref[...])                              # (tb, 2*E*O)

    # ---- softmaxes on the whole slab (no per-expert loop, no sub-vreg slices) ----
    # One per-row max is a valid shift for BOTH the gating softmax and every
    # expert's softmax (it is constant within each segment).
    m = jnp.max(z, axis=1, keepdims=True)             # single XLU reduce
    p = jnp.exp(z - m)                                # one EUP pass, full slab

    # Segment denominators with one MXU matmul against the precomputed
    # segment-sum matrix: gate columns get (1/O)*sum over all gl lanes
    # (each expert logit appears O times), expert columns get block-ones sums.
    den = jnp.dot(p, seg_ref[...], preferred_element_type=jnp.float32)
    den = jnp.maximum(den, 1e-30)                     # guard global-max underflow corner
    probs = p * pl.reciprocal(den, approx=True)       # divide -> idle EUP slot

    # gate[b, e*O+o] == softmax_E(gl)[e]; expert probs live in the second half.
    gated = probs[:, :EO] * probs[:, EO:]             # (tb, E*O)

    # Fold the E segments: out[b, o] = sum_e gate[b,e] * softmax_O(lo_e)[o]
    o_ref[...] = jnp.dot(gated, fold_ref[...],
                         preferred_element_type=jnp.float32)


def fuse_params(params, O):
    """One-time (init-time) weight fusion. NOT on the per-call path."""
    g1w, g1b, g2w, g2b, e1w, e1b, e2w, e2b = params
    D, GH = g1w.shape
    E, _, H = e1w.shape
    EO = E * O

    # layer-1 weights fused: (D, GH + E*H), expert-major column order e*H + h
    w1f = jnp.concatenate(
        [g1w, jnp.transpose(e1w, (1, 0, 2)).reshape(D, E * H)], axis=1)
    b1f = jnp.concatenate([g1b, e1b.reshape(1, E * H)], axis=1)

    # layer-2 weights fused: (GH + E*H, 2*E*O)
    #   [:GH, :EO]   = gating layer2 columns replicated O times  (gl slab)
    #   [GH:, EO:]   = block-diagonal expert layer2 weights      (lo slab)
    w2f = jnp.zeros((GH + E * H, 2 * EO), jnp.float32)
    w2f = w2f.at[:GH, :EO].set(jnp.repeat(g2w, O, axis=1))
    for e in range(E):
        w2f = w2f.at[GH + e * H:GH + (e + 1) * H,
                     EO + e * O:EO + (e + 1) * O].set(e2w[e])
    b2f = jnp.concatenate(
        [jnp.repeat(g2b, O, axis=1), e2b.reshape(1, EO)], axis=1)

    # segment-sum matrix (2*E*O, 2*E*O): gate denominators = (1/O)*sum over the
    # gl half (each expert counted O times); expert denominators = per-expert
    # block-ones over the lo half.
    seg = jnp.zeros((2 * EO, 2 * EO), jnp.float32)
    seg = seg.at[:EO, :EO].set(jnp.full((EO, EO), 1.0 / O, jnp.float32))
    seg = seg.at[EO:, EO:].set(
        jnp.kron(jnp.eye(E, dtype=jnp.float32), jnp.ones((O, O), jnp.float32)))

    # fold matrix (E*O, O): sums expert segments into the final O outputs.
    fold = jnp.tile(jnp.eye(O, dtype=jnp.float32), (E, 1))

    return (w1f, b1f, w2f, b2f, seg, fold)


@functools.partial(jax.jit, static_argnames=("tb_max",))
def moe_forward(x, fused, *, tb_max=256):
    """Fused MoE forward: the only per-call work is one pallas_call."""
    w1f, b1f, w2f, b2f, seg, fold = fused
    B, D = x.shape
    O = fold.shape[1]

    # ---- batch tiling: big tiles, but always an EVEN number of independent
    # "parallel" grid steps so both v7x TensorCores get work. ----
    n_tiles = max(2, -(-B // tb_max))
    if n_tiles % 2:
        n_tiles += 1
    tb = max(8, ((-(-B // n_tiles) + 7) // 8) * 8)
    B_pad = n_tiles * tb
    xp = x if B_pad == B else jnp.pad(x, ((0, B_pad - B), (0, 0)))

    def full_spec(a):
        nd = a.ndim
        return pl.BlockSpec(a.shape, lambda i, _nd=nd: (0,) * _nd)

    out = pl.pallas_call(
        moe_kernel,
        out_shape=jax.ShapeDtypeStruct((B_pad, O), jnp.float32),
        grid_spec=pltpu.PrefetchScalarGridSpec(
            num_scalar_prefetch=0,
            grid=(n_tiles,),
            in_specs=[
                pl.BlockSpec((tb, D), lambda i: (i, 0)),   # x tiled over batch
                full_spec(w1f), full_spec(b1f),            # resident fused weights
                full_spec(w2f), full_spec(b2f),
                full_spec(seg), full_spec(fold),
            ],
            out_specs=pl.BlockSpec((tb, O), lambda i: (i, 0)),
        ),
        # Independent batch tiles -> shard grid across the two v7x TCs.
        # Explicit VMEM budget (resident fused weights here are <200 KB; for
        # production dims re-derive tb against v7x's 64 MiB physical VMEM).
        compiler_params=pltpu.CompilerParams(
            dimension_semantics=("parallel",),
            vmem_limit_bytes=32 * 1024 * 1024),
    )(xp, w1f, b1f, w2f, b2f, seg, fold)
    return out if B_pad == B else out[:B]


def init_params(key, D, H, O, E, GH=128):
    ks = jax.random.split(key, 8)

    def lin(k, fan_in, shape):
        bound = 1.0 / float(fan_in) ** 0.5
        return jax.random.uniform(k, shape, jnp.float32, -bound, bound)

    g1w = lin(ks[0], D, (D, GH));   g1b = lin(ks[1], D, (1, GH))
    g2w = lin(ks[2], GH, (GH, E));  g2b = lin(ks[3], GH, (1, E))
    e1w = lin(ks[4], D, (E, D, H)); e1b = lin(ks[5], D, (E, 1, H))
    e2w = lin(ks[6], H, (E, H, O)); e2b = lin(ks[7], H, (E, 1, O))
    return g1w, g1b, g2w, g2b, e1w, e1b, e2w, e2b


def moe_reference(x, params):
    """Pure-JAX mirror of the PyTorch MoE.forward for validation."""
    g1w, g1b, g2w, g2b, e1w, e1b, e2w, e2b = params
    gh = jax.nn.relu(x @ g1w + g1b)
    gate = jax.nn.softmax(gh @ g2w + g2b, axis=1)                 # (B, E)
    outs = []
    for e in range(e1w.shape[0]):
        h = jax.nn.relu(x @ e1w[e] + e1b[e])
        outs.append(jax.nn.softmax(h @ e2w[e] + e2b[e], axis=1))
    outs = jnp.stack(outs, axis=2)                                # (B, O, E)
    return jnp.sum(outs * gate[:, None, :], axis=2)               # (B, O)


if __name__ == "__main__":
    # Small but TPU-meaningful shapes: two 256-row batch tiles -> 2 "parallel"
    # grid steps (keeps both v7x TCs busy); D/H/O/E match the book's toy MoE.
    B, D, H, O, E = 512, 32, 64, 8, 4
    key = jax.random.PRNGKey(0)
    kx, kp = jax.random.split(key)
    x = jax.random.normal(kx, (B, D), jnp.float32)

    params = init_params(kp, D, H, O, E)
    fused = jax.tree.map(jax.block_until_ready,
                         fuse_params(params, O))      # one-time, off the hot path

    out = jax.block_until_ready(moe_forward(x, fused, tb_max=256))
    ref = moe_reference(x, params)

    assert out.shape == (B, O), out.shape
    err = float(jnp.max(jnp.abs(out - ref)))
    # approx-reciprocal (EUP) path -> slightly looser tolerance than exact f32.
    assert jnp.allclose(out, ref, atol=2e-3, rtol=2e-3), f"max abs err {err}"
    print("KERNEL_OK")
</pallas_src>

<mosaic_0001>
module attributes {stable_mosaic.version = 11 : i64} {
  func.func @moe_kernel(%arg0: i32, %arg1: memref<256x32xf32, #tpu.memory_space<vmem>>, %arg2: memref<32x384xf32, #tpu.memory_space<vmem>>, %arg3: memref<1x384xf32, #tpu.memory_space<vmem>>, %arg4: memref<384x64xf32, #tpu.memory_space<vmem>>, %arg5: memref<1x64xf32, #tpu.memory_space<vmem>>, %arg6: memref<64x64xf32, #tpu.memory_space<vmem>>, %arg7: memref<32x8xf32, #tpu.memory_space<vmem>>, %arg8: memref<256x8xf32, #tpu.memory_space<vmem>>) attributes {dimension_semantics = [#tpu.dimension_semantics<parallel>], iteration_bounds = array<i64: 2>, scalar_prefetch = 0 : i64, scratch_operands = 0 : i64, tpu.core_type = #tpu.core_type<tc>, window_params = [{transform_indices = @transform_0, window_bounds = array<i64: 256, 32>}, {pipeline_mode = #tpu.pipeline_mode<synchronous>, transform_indices = @transform_1, window_bounds = array<i64: 32, 384>}, {pipeline_mode = #tpu.pipeline_mode<synchronous>, transform_indices = @transform_2, window_bounds = array<i64: 1, 384>}, {pipeline_mode = #tpu.pipeline_mode<synchronous>, transform_indices = @transform_3, window_bounds = array<i64: 384, 64>}, {pipeline_mode = #tpu.pipeline_mode<synchronous>, transform_indices = @transform_4, window_bounds = array<i64: 1, 64>}, {pipeline_mode = #tpu.pipeline_mode<synchronous>, transform_indices = @transform_5, window_bounds = array<i64: 64, 64>}, {pipeline_mode = #tpu.pipeline_mode<synchronous>, transform_indices = @transform_6, window_bounds = array<i64: 32, 8>}, {transform_indices = @transform_7, window_bounds = array<i64: 256, 8>}]} {
    %c0 = arith.constant 0 : index
    %c0_0 = arith.constant 0 : index
    %0 = vector.load %arg1[%c0, %c0_0] : memref<256x32xf32, #tpu.memory_space<vmem>>, vector<256x32xf32>
    %c0_1 = arith.constant 0 : index
    %c0_2 = arith.constant 0 : index
    %1 = vector.load %arg2[%c0_1, %c0_2] : memref<32x384xf32, #tpu.memory_space<vmem>>, vector<32x384xf32>
    %cst = arith.constant dense<0.000000e+00> : vector<256x384xf32>
    %2 = tpu.matmul %0, %1, %cst {dimension_numbers = #tpu.dot_dimension_numbers<[1], [0], [0], [1], [0, 0, 1, 1], [], []>} : vector<256x32xf32>, vector<32x384xf32>, vector<256x384xf32> -> vector<256x384xf32>
    %c0_3 = arith.constant 0 : index
    %c0_4 = arith.constant 0 : index
    %3 = vector.load %arg3[%c0_3, %c0_4] : memref<1x384xf32, #tpu.memory_space<vmem>>, vector<1x384xf32>
    %4 = vector.broadcast %3 : vector<1x384xf32> to vector<256x384xf32>
    %5 = arith.addf %2, %4 : vector<256x384xf32>
    %cst_5 = arith.constant 0.000000e+00 : f32
    %6 = vector.broadcast %cst_5 : f32 to vector<256x384xf32>
    %7 = arith.maximumf %5, %6 : vector<256x384xf32>
    %c0_6 = arith.constant 0 : index
    %c0_7 = arith.constant 0 : index
    %8 = vector.load %arg4[%c0_6, %c0_7] : memref<384x64xf32, #tpu.memory_space<vmem>>, vector<384x64xf32>
    %cst_8 = arith.constant dense<0.000000e+00> : vector<256x64xf32>
    %9 = tpu.matmul %7, %8, %cst_8 {dimension_numbers = #tpu.dot_dimension_numbers<[1], [0], [0], [1], [0, 0, 1, 1], [], []>} : vector<256x384xf32>, vector<384x64xf32>, vector<256x64xf32> -> vector<256x64xf32>
    %c0_9 = arith.constant 0 : index
    %c0_10 = arith.constant 0 : index
    %10 = vector.load %arg5[%c0_9, %c0_10] : memref<1x64xf32, #tpu.memory_space<vmem>>, vector<1x64xf32>
    %11 = vector.broadcast %10 : vector<1x64xf32> to vector<256x64xf32>
    %12 = arith.addf %9, %11 : vector<256x64xf32>
    %cst_11 = arith.constant dense<0xFF800000> : vector<256xf32>
    %13 = vector.multi_reduction <maximumf>, %12, %cst_11 [1] : vector<256x64xf32> to vector<256xf32>
    %14 = vector.shape_cast %13 : vector<256xf32> to vector<256x1xf32>
    %15 = vector.broadcast %14 : vector<256x1xf32> to vector<256x64xf32>
    %16 = arith.subf %12, %15 : vector<256x64xf32>
    %17 = math.exp %16 : vector<256x64xf32>
    %c0_12 = arith.constant 0 : index
    %c0_13 = arith.constant 0 : index
    %18 = vector.load %arg6[%c0_12, %c0_13] : memref<64x64xf32, #tpu.memory_space<vmem>>, vector<64x64xf32>
    %cst_14 = arith.constant dense<0.000000e+00> : vector<256x64xf32>
    %19 = tpu.matmul %17, %18, %cst_14 {dimension_numbers = #tpu.dot_dimension_numbers<[1], [0], [0], [1], [0, 0, 1, 1], [], []>} : vector<256x64xf32>, vector<64x64xf32>, vector<256x64xf32> -> vector<256x64xf32>
    %cst_15 = arith.constant 1.000000e-30 : f32
    %20 = vector.broadcast %cst_15 : f32 to vector<256x64xf32>
    %21 = arith.maximumf %19, %20 : vector<256x64xf32>
    %22 = tpu.reciprocal %21 {approx = true} : vector<256x64xf32> -> vector<256x64xf32>
    %23 = arith.mulf %17, %22 : vector<256x64xf32>
    %24 = vector.extract_strided_slice %23 {offsets = [0, 0], sizes = [256, 32], strides = [1, 1]} : vector<256x64xf32> to vector<256x32xf32>
    %25 = vector.extract_strided_slice %23 {offsets = [0, 32], sizes = [256, 32], strides = [1, 1]} : vector<256x64xf32> to vector<256x32xf32>
    %26 = arith.mulf %24, %25 : vector<256x32xf32>
    %c0_16 = arith.constant 0 : index
    %c0_17 = arith.constant 0 : index
    %27 = vector.load %arg7[%c0_16, %c0_17] : memref<32x8xf32, #tpu.memory_space<vmem>>, vector<32x8xf32>
    %cst_18 = arith.constant dense<0.000000e+00> : vector<256x8xf32>
    %28 = tpu.matmul %26, %27, %cst_18 {dimension_numbers = #tpu.dot_dimension_numbers<[1], [0], [0], [1], [0, 0, 1, 1], [], []>} : vector<256x32xf32>, vector<32x8xf32>, vector<256x8xf32> -> vector<256x8xf32>
    %c0_19 = arith.constant 0 : index
    %c0_20 = arith.constant 0 : index
    %29 = vector.load %arg8[%c0_19, %c0_20] : memref<256x8xf32, #tpu.memory_space<vmem>>, vector<256x8xf32>
    tpu.vector_store %arg8[%c0_19, %c0_20], %28 {strides = array<i32>} : memref<256x8xf32, #tpu.memory_space<vmem>>, vector<256x8xf32>,
    return
  }
  func.func @transform_0(%arg0: i32) -> (i32, i32) {
    %c0_i32 = arith.constant 0 : i32
    %c0_i32_0 = arith.constant 0 : i32
    return %arg0, %c0_i32 : i32, i32
  }
  func.func @transform_1(%arg0: i32) -> (i32, i32) {
    %c0_i32 = arith.constant 0 : i32
    %c0_i32_0 = arith.constant 0 : i32
    %c0_i32_1 = arith.constant 0 : i32
    return %c0_i32, %c0_i32_0 : i32, i32
  }
  func.func @transform_2(%arg0: i32) -> (i32, i32) {
    %c0_i32 = arith.constant 0 : i32
    %c0_i32_0 = arith.constant 0 : i32
    %c0_i32_1 = arith.constant 0 : i32
    return %c0_i32, %c0_i32_0 : i32, i32
  }
  func.func @transform_3(%arg0: i32) -> (i32, i32) {
    %c0_i32 = arith.constant 0 : i32
    %c0_i32_0 = arith.constant 0 : i32
    %c0_i32_1 = arith.constant 0 : i32
    return %c0_i32, %c0_i32_0 : i32, i32
  }
  func.func @transform_4(%arg0: i32) -> (i32, i32) {
    %c0_i32 = arith.constant 0 : i32
    %c0_i32_0 = arith.constant 0 : i32
    %c0_i32_1 = arith.constant 0 : i32
    return %c0_i32, %c0_i32_0 : i32, i32
  }
  func.func @transform_5(%arg0: i32) -> (i32, i32) {
    %c0_i32 = arith.constant 0 : i32
    %c0_i32_0 = arith.constant 0 : i32
    %c0_i32_1 = arith.constant 0 : i32
    return %c0_i32, %c0_i32_0 : i32, i32
  }
  func.func @transform_6(%arg0: i32) -> (i32, i32) {
    %c0_i32 = arith.constant 0 : i32
    %c0_i32_0 = arith.constant 0 : i32
    %c0_i32_1 = arith.constant 0 : i32
    return %c0_i32, %c0_i32_0 : i32, i32
  }
  func.func @transform_7(%arg0: i32) -> (i32, i32) {
    %c0_i32 = arith.constant 0 : i32
    %c0_i32_0 = arith.constant 0 : i32
    return %arg0, %c0_i32 : i32, i32
  }
}

</mosaic_0001>

<llo_original>
// kernel: moe_forward.1
$region0: #{moe_forward.1}
  #allocation0 [shape = 'u32[]', space=smem, size = 0x4, offset = 0x4, fixed_abs, tag = 'smem constant byte address 0x4 - core index']
  #allocation1 [shape = 'u32[144,128]{1,0:T(1,128)}', space=vmem, size = 0x12000, scoped, tag = 'internal scratch']
  %s0 = inlined_call_operand.vmem [shape: f32[512,32], index: 0, kind: input, shape index: {}]
  %s1 = inlined_call_operand.vmem [shape: f32[32,384], index: 1, kind: input, shape index: {}]
  %s2 = inlined_call_operand.vmem [shape: f32[1,384], index: 2, kind: input, shape index: {}]
  %s3 = inlined_call_operand.vmem [shape: f32[384,64], index: 3, kind: input, shape index: {}]
  %s4 = inlined_call_operand.vmem [shape: f32[1,64], index: 4, kind: input, shape index: {}]
  %s5 = inlined_call_operand.vmem [shape: f32[64,64], index: 5, kind: input, shape index: {}]
  %s6 = inlined_call_operand.vmem [shape: f32[32,8], index: 6, kind: input, shape index: {}]
  %s7 = inlined_call_operand.vmem [shape: f32[512,8], index: 7, kind: output, shape index: {}]
  %s8 = sld [smem:[#allocation0]]
  $region61: #{moe_forward.1} parent=0
    _
  %s10 = ssub.s32 1, %s8
  %s11 = scalar_select 0, %s10, %s8
  loop: start=0, step=1, limit=4
  $region2: #{moe_forward.1} parent=0 // loop_pre_header
    _
  $region3: #{moe_forward.1} parent=0 // loop_header
    %s13 = sphi 0, %s17
    %p14 = scmp.ge.s32.totalorder %s13, 4
    %s23 = sphi 0, %s25
    %s26 = sphi 0, %s23
    %s27 = sphi 0, %s26
    %s43 = sphi 0, %s27
    %s47 = sphi 0, %s47
    %s49 = sphi 0, %s47
    %s50 = sphi 0, %s49
    %s64 = sphi 0, %s50
    %s68 = sphi 0, %s68
    %s70 = sphi 0, %s68
    %s71 = sphi 0, %s70
    %s85 = sphi 0, %s71
    %s89 = sphi 0, %s89
    %s91 = sphi 0, %s89
    %s92 = sphi 0, %s91
    %s106 = sphi 0, %s92
    %s110 = sphi 0, %s110
    %s112 = sphi 0, %s110
    %s113 = sphi 0, %s112
    %s127 = sphi 0, %s113
    %s131 = sphi 0, %s131
    %s133 = sphi 0, %s131
    %s134 = sphi 0, %s133
    %s148 = sphi 0, %s134
    %s152 = sphi 0, %s152
    %s154 = sphi 0, %s152
    %s155 = sphi 0, %s154
    %s169 = sphi 0, %s155
    %s175 = sphi 0, %s177
    %s178 = sphi 0, %s175
    %s179 = sphi 0, %s178
    %s195 = sphi 0, %s179
  $region4: #{moe_forward.1} parent=0 // loop_header_branch
    %16 = sbr.rel (%p14) target = $region8
  $region5: #{moe_forward.1} parent=0 // loop_body
    %s18 = ssub.s32 %s13, 1
    %s19 = ssub.s32 %s13, 2
    %s20 = sadd.s32 %s13, 1
    %s21 = ssub.s32 %s13, %s20
    %p22 = scmp.eq.s32.totalorder %s21, 0
    %s24 = sadd.s32 %s23, 1
    %s25 = scalar_select %p22, %s23, %s24
    %p28 = pneg %p22
    %p29 = scmp.eq.s32.totalorder %s13, 1
    %p30 = por %p28, %p29
    %p31 = scmp.ne.s32.totalorder %s23, %s26
    %p32 = scmp.eq.s32.totalorder %s13, 0
    %p33 = por %p31, %p32
    %p34 = scmp.ne.s32.totalorder %s23, %s26
    %p35 = scmp.eq.s32.totalorder %s18, 1
    %p36 = por %p34, %p35
    %p37 = scmp.ne.s32.totalorder %s26, %s27
    %p38 = scmp.eq.s32.totalorder %s18, 0
    %p39 = por %p37, %p38
    %p40 = scmp.ne.s32.totalorder %s26, %s27
    %p41 = scmp.eq.s32.totalorder %s19, 1
    %p42 = por %p40, %p41
    %p44 = scmp.ne.s32.totalorder %s27, %s43
    %p45 = scmp.eq.s32.totalorder %s19, 0
    %p46 = por %p44, %p45
    %s48 = sadd.s32 %s47, 1
    %p51 = scmp.eq.s32.totalorder %s13, 1
    %p52 = scmp.ne.s32.totalorder %s47, %s49
    %p53 = scmp.eq.s32.totalorder %s13, 0
    %p54 = por %p52, %p53
    %p55 = scmp.ne.s32.totalorder %s47, %s49
    %p56 = scmp.eq.s32.totalorder %s18, 1
    %p57 = por %p55, %p56
    %p58 = scmp.ne.s32.totalorder %s49, %s50
    %p59 = scmp.eq.s32.totalorder %s18, 0
    %p60 = por %p58, %p59
    %p61 = scmp.ne.s32.totalorder %s49, %s50
    %p62 = scmp.eq.s32.totalorder %s19, 1
    %p63 = por %p61, %p62
    %p65 = scmp.ne.s32.totalorder %s50, %s64
    %p66 = scmp.eq.s32.totalorder %s19, 0
    %p67 = por %p65, %p66
    %s69 = sadd.s32 %s68, 1
    %p72 = scmp.eq.s32.totalorder %s13, 1
    %p73 = scmp.ne.s32.totalorder %s68, %s70
    %p74 = scmp.eq.s32.totalorder %s13, 0
    %p75 = por %p73, %p74
    %p76 = scmp.ne.s32.totalorder %s68, %s70
    %p77 = scmp.eq.s32.totalorder %s18, 1
    %p78 = por %p76, %p77
    %p79 = scmp.ne.s32.totalorder %s70, %s71
    %p80 = scmp.eq.s32.totalorder %s18, 0
    %p81 = por %p79, %p80
    %p82 = scmp.ne.s32.totalorder %s70, %s71
    %p83 = scmp.eq.s32.totalorder %s19, 1
    %p84 = por %p82, %p83
    %p86 = scmp.ne.s32.totalorder %s71, %s85
    %p87 = scmp.eq.s32.totalorder %s19, 0
    %p88 = por %p86, %p87
    %s90 = sadd.s32 %s89, 1
    %p93 = scmp.eq.s32.totalorder %s13, 1
    %p94 = scmp.ne.s32.totalorder %s89, %s91
    %p95 = scmp.eq.s32.totalorder %s13, 0
    %p96 = por %p94, %p95
    %p97 = scmp.ne.s32.totalorder %s89, %s91
    %p98 = scmp.eq.s32.totalorder %s18, 1
    %p99 = por %p97, %p98
    %p100 = scmp.ne.s32.totalorder %s91, %s92
    %p101 = scmp.eq.s32.totalorder %s18, 0
    %p102 = por %p100, %p101
    %p103 = scmp.ne.s32.totalorder %s91, %s92
    %p104 = scmp.eq.s32.totalorder %s19, 1
    %p105 = por %p103, %p104
    %p107 = scmp.ne.s32.totalorder %s92, %s106
    %p108 = scmp.eq.s32.totalorder %s19, 0
    %p109 = por %p107, %p108
    %s111 = sadd.s32 %s110, 1
    %p114 = scmp.eq.s32.totalorder %s13, 1
    %p115 = scmp.ne.s32.totalorder %s110, %s112
    %p116 = scmp.eq.s32.totalorder %s13, 0
    %p117 = por %p115, %p116
    %p118 = scmp.ne.s32.totalorder %s110, %s112
    %p119 = scmp.eq.s32.totalorder %s18, 1
    %p120 = por %p118, %p119
    %p121 = scmp.ne.s32.totalorder %s112, %s113
    %p122 = scmp.eq.s32.totalorder %s18, 0
    %p123 = por %p121, %p122
    %p124 = scmp.ne.s32.totalorder %s112, %s113
    %p125 = scmp.eq.s32.totalorder %s19, 1
    %p126 = por %p124, %p125
    %p128 = scmp.ne.s32.totalorder %s113, %s127
    %p129 = scmp.eq.s32.totalorder %s19, 0
    %p130 = por %p128, %p129
    %s132 = sadd.s32 %s131, 1
    %p135 = scmp.eq.s32.totalorder %s13, 1
    %p136 = scmp.ne.s32.totalorder %s131, %s133
    %p137 = scmp.eq.s32.totalorder %s13, 0
    %p138 = por %p136, %p137
    %p139 = scmp.ne.s32.totalorder %s131, %s133
    %p140 = scmp.eq.s32.totalorder %s18, 1
    %p141 = por %p139, %p140
    %p142 = scmp.ne.s32.totalorder %s133, %s134
    %p143 = scmp.eq.s32.totalorder %s18, 0
    %p144 = por %p142, %p143
    %p145 = scmp.ne.s32.totalorder %s133, %s134
    %p146 = scmp.eq.s32.totalorder %s19, 1
    %p147 = por %p145, %p146
    %p149 = scmp.ne.s32.totalorder %s134, %s148
    %p150 = scmp.eq.s32.totalorder %s19, 0
    %p151 = por %p149, %p150
    %s153 = sadd.s32 %s152, 1
    %p156 = scmp.eq.s32.totalorder %s13, 1
    %p157 = scmp.ne.s32.totalorder %s152, %s154
    %p158 = scmp.eq.s32.totalorder %s13, 0
    %p159 = por %p157, %p158
    %p160 = scmp.ne.s32.totalorder %s152, %s154
    %p161 = scmp.eq.s32.totalorder %s18, 1
    %p162 = por %p160, %p161
    %p163 = scmp.ne.s32.totalorder %s154, %s155
    %p164 = scmp.eq.s32.totalorder %s18, 0
    %p165 = por %p163, %p164
    %p166 = scmp.ne.s32.totalorder %s154, %s155
    %p167 = scmp.eq.s32.totalorder %s19, 1
    %p168 = por %p166, %p167
    %p170 = scmp.ne.s32.totalorder %s155, %s169
    %p171 = scmp.eq.s32.totalorder %s19, 0
    %p172 = por %p170, %p171
    %s173 = ssub.s32 %s13, %s20
    %p174 = scmp.eq.s32.totalorder %s173, 0
    %s176 = sadd.s32 %s175, 1
    %s177 = scalar_select %p174, %s175, %s176
    %p180 = pneg %p174
    %p181 = scmp.eq.s32.totalorder %s13, 1
    %p182 = por %p180, %p181
    %p183 = scmp.ne.s32.totalorder %s175, %s178
    %p184 = scmp.eq.s32.totalorder %s13, 0
    %p185 = por %p183, %p184
    %p186 = scmp.ne.s32.totalorder %s175, %s178
    %p187 = scmp.eq.s32.totalorder %s18, 1
    %p188 = por %p186, %p187
    %p189 = scmp.ne.s32.totalorder %s178, %s179
    %p190 = scmp.eq.s32.totalorder %s18, 0
    %p191 = por %p189, %p190
    %p192 = scmp.ne.s32.totalorder %s178, %s179
    %p193 = scmp.eq.s32.totalorder %s19, 1
    %p194 = por %p192, %p193
    %p196 = scmp.ne.s32.totalorder %s179, %s195
    %p197 = scmp.eq.s32.totalorder %s19, 0
    %p198 = por %p196, %p197
    %p199 = scmp.le.s32.totalorder 1, %s13
    %p200 = scmp.lt.s32.totalorder %s13, 3
    %p201 = pnand %p199, %p200
    %p202 = pneg %p201
    // Predicated region
    $region9: #{moe_forward.1} parent=5 // pred_check
      _
    $region10: #{moe_forward.1} parent=5 // pred_check_branch
      %204 = sbr.rel (%p201) target = $region12
    $region11: #{moe_forward.1} parent=5 // pred_region
      %s205 = ssub.s32 %s13, 1
      // Predicated region
      $region13: #{moe_forward.1} parent=11 // pred_check
        %p206 = pneg %p60
      $region14: #{moe_forward.1} parent=11 // pred_check_branch
        %208 = sbr.rel (%p206) target = $region16
      $region15: #{moe_forward.1} parent=11 // pred_region
        _
      $region16: #{moe_forward.1} parent=11 // pred_fallthru
        _
      // Predicated region
      $region17: #{moe_forward.1} parent=11 // pred_check
        %p209 = pneg %p81
      $region18: #{moe_forward.1} parent=11 // pred_check_branch
        %211 = sbr.rel (%p209) target = $region20
      $region19: #{moe_forward.1} parent=11 // pred_region
        _
      $region20: #{moe_forward.1} parent=11 // pred_fallthru
        _
      // Predicated region
      $region21: #{moe_forward.1} parent=11 // pred_check
        %p212 = pneg %p102
      $region22: #{moe_forward.1} parent=11 // pred_check_branch
        %214 = sbr.rel (%p212) target = $region24
      $region23: #{moe_forward.1} parent=11 // pred_region
        _
      $region24: #{moe_forward.1} parent=11 // pred_fallthru
        _
      // Predicated region
      $region25: #{moe_forward.1} parent=11 // pred_check
        %p215 = pneg %p123
      $region26: #{moe_forward.1} parent=11 // pred_check_branch
        %217 = sbr.rel (%p215) target = $region28
      $region27: #{moe_forward.1} parent=11 // pred_region
        _
      $region28: #{moe_forward.1} parent=11 // pred_fallthru
        _
      // Predicated region
      $region29: #{moe_forward.1} parent=11 // pred_check
        %p218 = pneg %p144
      $region30: #{moe_forward.1} parent=11 // pred_check_branch
        %220 = sbr.rel (%p218) target = $region32
      $region31: #{moe_forward.1} parent=11 // pred_region
        _
      $region32: #{moe_forward.1} parent=11 // pred_fallthru
        _
      // Predicated region
      $region33: #{moe_forward.1} parent=11 // pred_check
        %p221 = pneg %p165
      $region34: #{moe_forward.1} parent=11 // pred_check_branch
        %223 = sbr.rel (%p221) target = $region36
      $region35: #{moe_forward.1} parent=11 // pred_region
        _
      $region36: #{moe_forward.1} parent=11 // pred_fallthru
        _
    $region12: #{moe_forward.1} parent=5 // pred_fallthru
      _
    %p224 = scmp.lt.s32.totalorder %s13, 2
    // Predicated region
    $region37: #{moe_forward.1} parent=5 // pred_check
      %p225 = pneg %p224
    $region38: #{moe_forward.1} parent=5 // pred_check_branch
      %227 = sbr.rel (%p225) target = $region40
    $region39: #{moe_forward.1} parent=5 // pred_region
      // Predicated region
      $region41: #{moe_forward.1} parent=39 // pred_check
        %p228 = pneg %p33
      $region42: #{moe_forward.1} parent=39 // pred_check_branch
        %230 = sbr.rel (%p228) target = $region44
      $region43: #{moe_forward.1} parent=39 // pred_region
        %s231 = smul.u32 32, %s13
        %p232 = scmp.lt.s32.totalorder %s231, 63
        %s233 = scalar_select %p232, %s231, 63
        %s234 = smul.addr %s233, 8
        %s235 = scalar_lea.vmem %s0, %s234
        %s236 = smul.u32 32, %s13
      $region44: #{moe_forward.1} parent=39 // pred_fallthru
        _
    $region40: #{moe_forward.1} parent=5 // pred_fallthru
      _
    %p237 = scmp.le.s32.totalorder 1, %s13
    %p238 = scmp.lt.s32.totalorder %s13, 3
    %p239 = pnand %p237, %p238
    %p240 = pneg %p239
    // Predicated region
    $region45: #{moe_forward.1} parent=5 // pred_check
      _
    $region46: #{moe_forward.1} parent=5 // pred_check_branch
      %242 = sbr.rel (%p239) target = $region48
    $region47: #{moe_forward.1} parent=5 // pred_region
      %s243 = ssub.s32 %s13, 1
      %s244 = smul.u32 32, %s18
      %p245 = scmp.lt.s32.totalorder %s244, 63
      %s246 = scalar_select %p245, %s244, 63
      %s247 = smul.addr %s246, 8
      %s248 = scalar_lea.vmem %s0, %s247
      %p249 = pneg %p39
      %p250 = pneg %p36
      %p251 = pneg %p60
      %p252 = pneg %p57
      %p253 = pneg %p81
      %p254 = pneg %p78
      %p255 = pneg %p102
      %p256 = pneg %p99
      %p257 = pneg %p123
      %p258 = pneg %p120
      %p259 = pneg %p144
      %p260 = pneg %p141
      %p261 = pneg %p165
      %p262 = pneg %p162
      %p263 = pneg %p191
      %p264 = pneg %p188
      %s265 = smul.u32 32, %s18
      %p266 = scmp.lt.s32.totalorder %s265, 63
      %s267 = scalar_select %p266, %s265, 63
      %s268 = smul.addr %s267, 8
      %s269 = scalar_lea.vmem %s7, %s268
      %s270 = smul.u32 32, %s18
      %p271 = scmp.lt.s32.totalorder %s270, 63
      %s272 = scalar_select %p271, %s270, 63
      %s273 = smul.addr %s272, 8
      %s274 = scalar_lea.vmem %s0, %s273
      %s275 = smul.u32 32, %s18
      %s276 = smul.u32 32, %s18
      %p277 = scmp.lt.s32.totalorder %s276, 63
      %s278 = scalar_select %p277, %s276, 63
      %s279 = smul.addr %s278, 8
      %s280 = scalar_lea.vmem %s7, %s279
      %s281 = smul.u32 32, %s18
      %v282 = vld [vmem:[%s274] sm:$0xff]
      %v283 = vld [vmem:[%s274 + $0x8] sm:$0xff]
      %v284 = vld [vmem:[%s274 + $0x10] sm:$0xff]
      %v285 = vld [vmem:[%s274 + $0x18] sm:$0xff]
      %v286 = vld [vmem:[%s274 + $0x20] sm:$0xff]
      %v287 = vld [vmem:[%s274 + $0x28] sm:$0xff]
      %v288 = vld [vmem:[%s274 + $0x30] sm:$0xff]
      %v289 = vld [vmem:[%s274 + $0x38] sm:$0xff]
      %v290 = vld [vmem:[%s274 + $0x40] sm:$0xff]
      %v291 = vld [vmem:[%s274 + $0x48] sm:$0xff]
      %v292 = vld [vmem:[%s274 + $0x50] sm:$0xff]
      %v293 = vld [vmem:[%s274 + $0x58] sm:$0xff]
      %v294 = vld [vmem:[%s274 + $0x60] sm:$0xff]
      %v295 = vld [vmem:[%s274 + $0x68] sm:$0xff]
      %v296 = vld [vmem:[%s274 + $0x70] sm:$0xff]
      %v297 = vld [vmem:[%s274 + $0x78] sm:$0xff]
      %v298 = vld [vmem:[%s274 + $0x80] sm:$0xff]
      %v299 = vld [vmem:[%s274 + $0x88] sm:$0xff]
      %v300 = vld [vmem:[%s274 + $0x90] sm:$0xff]
      %v301 = vld [vmem:[%s274 + $0x98] sm:$0xff]
      %v302 = vld [vmem:[%s274 + $0xa0] sm:$0xff]
      %v303 = vld [vmem:[%s274 + $0xa8] sm:$0xff]
      %v304 = vld [vmem:[%s274 + $0xb0] sm:$0xff]
      %v305 = vld [vmem:[%s274 + $0xb8] sm:$0xff]
      %v306 = vld [vmem:[%s274 + $0xc0] sm:$0xff]
      %v307 = vld [vmem:[%s274 + $0xc8] sm:$0xff]
      %v308 = vld [vmem:[%s274 + $0xd0] sm:$0xff]
      %v309 = vld [vmem:[%s274 + $0xd8] sm:$0xff]
      %v310 = vld [vmem:[%s274 + $0xe0] sm:$0xff]
      %v311 = vld [vmem:[%s274 + $0xe8] sm:$0xff]
      %v312 = vld [vmem:[%s274 + $0xf0] sm:$0xff]
      %v313 = vld [vmem:[%s274 + $0xf8] sm:$0xff]
      %v314 = vld [vmem:[%s1] sm:$0xff]
      %v315 = vld [vmem:[%s1 + $0x8] sm:$0xff]
      %v316 = vld [vmem:[%s1 + $0x10] sm:$0xff]
      %v317 = vld [vmem:[%s1 + $0x18] sm:$0xff]
      %v318 = vld [vmem:[%s1 + $0x20] sm:$0xff]
      %v319 = vld [vmem:[%s1 + $0x28] sm:$0xff]
      %v320 = vld [vmem:[%s1 + $0x30] sm:$0xff]
      %v321 = vld [vmem:[%s1 + $0x38] sm:$0xff]
      %v322 = vld [vmem:[%s1 + $0x40] sm:$0xff]
      %v323 = vld [vmem:[%s1 + $0x48] sm:$0xff]
      %v324 = vld [vmem:[%s1 + $0x50] sm:$0xff]
      %v325 = vld [vmem:[%s1 + $0x58] sm:$0xff]
      %v326 = vld [vmem:[%s2] sm:$0x7]
      %v328 = vlaneseq
      %v329 = vshrl.u32 %v328, 7
      %v330 = vsub.s32 0, %v329
      %v331 = vrot.slane %v326, %v330
      %v332 = vlaneseq
      %v333 = vshrl.u32 %v332, 7
      %v334 = vsub.s32 1, %v333
      %v335 = vrot.slane %v326, %v334
      %v336 = vlaneseq
      %v337 = vshrl.u32 %v336, 7
      %v338 = vsub.s32 2, %v337
      %v339 = vrot.slane %v326, %v338
      %vm343 = vcmask 261120
      %v345 = vsel %vm343, %v282, 0
      %v348 = vsel %vm343, %v283, 0
      %v351 = vsel %vm343, %v284, 0
      %v354 = vsel %vm343, %v285, 0
      %v357 = vsel %vm343, %v286, 0
      %v360 = vsel %vm343, %v287, 0
      %v363 = vsel %vm343, %v288, 0
      %v366 = vsel %vm343, %v289, 0
      %v369 = vsel %vm343, %v290, 0
      %v372 = vsel %vm343, %v291, 0
      %v375 = vsel %vm343, %v292, 0
      %v378 = vsel %vm343, %v293, 0
      %v381 = vsel %vm343, %v294, 0
      %v384 = vsel %vm343, %v295, 0
      %v387 = vsel %vm343, %v296, 0
      %v390 = vsel %vm343, %v297, 0
      %v393 = vsel %vm343, %v298, 0
      %v396 = vsel %vm343, %v299, 0
      %v399 = vsel %vm343, %v300, 0
      %v402 = vsel %vm343, %v301, 0
      %v405 = vsel %vm343, %v302, 0
      %v408 = vsel %vm343, %v303, 0
      %v411 = vsel %vm343, %v304, 0
      %v414 = vsel %vm343, %v305, 0
      %v417 = vsel %vm343, %v306, 0
      %v420 = vsel %vm343, %v307, 0
      %v423 = vsel %vm343, %v308, 0
      %v426 = vsel %vm343, %v309, 0
      %v429 = vsel %vm343, %v310, 0
      %v432 = vsel %vm343, %v311, 0
      %v435 = vsel %vm343, %v312, 0
      %v438 = vsel %vm343, %v313, 0
      %440 = vmatprep.subr.mxu0 0.0
      %441 = vmatpush1.msra.mxu0 0.0
      %442 = vmatprep.subr.mxu0 0.0
      %443 = vmatpush1.msra.mxu0 0.0
      %444 = vmatprep.subr.mxu0 0.0
      %445 = vmatpush1.msra.mxu0 0.0
      %446 = vmatprep.subr.mxu0 0.0
      %447 = vmatpush1.msra.mxu0 0.0
      %448 = vmatprep.subr.mxu0 0.0
      %449 = vmatpush1.msra.mxu0 0.0
      %450 = vmatprep.subr.mxu0 0.0
      %451 = vmatpush1.msra.mxu0 0.0
      %452 = vmatprep.subr.mxu0 0.0
      %453 = vmatpush1.msra.mxu0 0.0
      %454 = vmatprep.subr.mxu0 0.0
      %455 = vmatpush1.msra.mxu0 0.0
      %456 = vmatprep.subr.mxu0 0.0
      %457 = vmatpush1.msra.mxu0 0.0
      %458 = vmatprep.subr.mxu0 0.0
      %459 = vmatpush1.msra.mxu0 0.0
      %460 = vmatprep.subr.mxu0 0.0
      %461 = vmatpush1.msra.mxu0 0.0
      %462 = vmatprep.subr.mxu0 0.0
      %463 = vmatpush1.msra.mxu0 0.0
      %464 = vmatprep.subr.mxu0 %v324
      %465 = vmatpush1.msra.mxu0 %v323
      %466 = vmatprep.subr.mxu0 %v321
      %467 = vmatpush1.msra.mxu0 %v320
      %468 = vmatprep.subr.mxu0 %v318
      %469 = vmatpush1.msra.mxu0 %v317
      %470 = vmatprep.subr.mxu0 %v315
      %471 = vmatpush1.msra.mxu0 %v314
      %472 = vmatprep.subr.mxu0 0.0
      %473 = vmatpush2.msra.mxu0 0.0
      %474 = vmatprep.subr.mxu0 0.0
      %475 = vmatpush2.msra.mxu0 0.0
      %476 = vmatprep.subr.mxu0 0.0
      %477 = vmatpush2.msra.mxu0 0.0
      %478 = vmatprep.subr.mxu0 0.0
      %479 = vmatpush2.msra.mxu0 0.0
      %480 = vmatprep.subr.mxu0 0.0
      %481 = vmatpush2.msra.mxu0 0.0
      %482 = vmatprep.subr.mxu0 0.0
      %483 = vmatpush2.msra.mxu0 0.0
      %484 = vmatprep.subr.mxu0 0.0
      %485 = vmatpush2.msra.mxu0 0.0
      %486 = vmatprep.subr.mxu0 0.0
      %487 = vmatpush2.msra.mxu0 0.0
      %488 = vmatprep.subr.mxu0 0.0
      %489 = vmatpush2.msra.mxu0 0.0
      %490 = vmatprep.subr.mxu0 0.0
      %491 = vmatpush2.msra.mxu0 0.0
      %492 = vmatprep.subr.mxu0 0.0
      %493 = vmatpush2.msra.mxu0 0.0
      %494 = vmatprep.subr.mxu0 0.0
      %495 = vmatpush2.msra.mxu0 0.0
      %496 = vmatprep.subr.mxu0 0.0
      %497 = vmatpush2.msra.mxu0 0.0
      %498 = vmatprep.subr.mxu0 0.0
      %499 = vmatpush2.msra.mxu0 0.0
      %500 = vmatprep.subr.mxu0 0.0
      %501 = vmatpush2.msra.mxu0 0.0
      %502 = vmatprep.subr.mxu0 0.0
      %503 = vmatpush2.msra.mxu0 0.0
      %504 = vmatprep.mubr.f32.mxu0 0.0
      %505 = vmatmul.mubr.f32.gmra.mxu0 %v345
      %v506 = vpop.f32.mrf.mxu0
      %v507 = vadd.f32 %v331, %v506
      %v508 = vpop.f32.mrf.mxu0
      %v509 = vadd.f32 %v335, %v508
      %510 = vmatprep.mubr.f32.mxu0 0.0
      %511 = vmatmul.mubr.f32.gmra.mxu0 %v348
      %v512 = vpop.f32.mrf.mxu0
      %v513 = vadd.f32 %v331, %v512
      %v514 = vpop.f32.mrf.mxu0
      %v515 = vadd.f32 %v335, %v514
      %516 = vmatprep.mubr.f32.mxu0 0.0
      %517 = vmatmul.mubr.f32.gmra.mxu0 %v351
      %v518 = vpop.f32.mrf.mxu0
      %v519 = vadd.f32 %v331, %v518
      %v520 = vpop.f32.mrf.mxu0
      %v521 = vadd.f32 %v335, %v520
      %522 = vmatprep.mubr.f32.mxu0 0.0
      %523 = vmatmul.mubr.f32.gmra.mxu0 %v354
      %v524 = vpop.f32.mrf.mxu0
      %v525 = vadd.f32 %v331, %v524
      %v526 = vpop.f32.mrf.mxu0
      %v527 = vadd.f32 %v335, %v526
      %528 = vmatprep.mubr.f32.mxu0 0.0
      %529 = vmatmul.mubr.f32.gmra.mxu0 %v357
      %v530 = vpop.f32.mrf.mxu0
      %v531 = vadd.f32 %v331, %v530
      %v532 = vpop.f32.mrf.mxu0
      %v533 = vadd.f32 %v335, %v532
      %534 = vmatprep.mubr.f32.mxu0 0.0
      %535 = vmatmul.mubr.f32.gmra.mxu0 %v360
      %v536 = vpop.f32.mrf.mxu0
      %v537 = vadd.f32 %v331, %v536
      %v538 = vpop.f32.mrf.mxu0
      %v539 = vadd.f32 %v335, %v538
      %540 = vmatprep.mubr.f32.mxu0 0.0
      %541 = vmatmul.mubr.f32.gmra.mxu0 %v363
      %v542 = vpop.f32.mrf.mxu0
      %v543 = vadd.f32 %v331, %v542
      %v544 = vpop.f32.mrf.mxu0
      %v545 = vadd.f32 %v335, %v544
      %546 = vmatprep.mubr.f32.mxu0 0.0
      %547 = vmatmul.mubr.f32.gmra.mxu0 %v366
      %v548 = vpop.f32.mrf.mxu0
      %v549 = vadd.f32 %v331, %v548
      %v550 = vpop.f32.mrf.mxu0
      %v551 = vadd.f32 %v335, %v550
      %552 = vmatprep.mubr.f32.mxu0 0.0
      %553 = vmatmul.mubr.f32.gmra.mxu0 %v369
      %v554 = vpop.f32.mrf.mxu0
      %v555 = vadd.f32 %v331, %v554
      %v556 = vpop.f32.mrf.mxu0
      %v557 = vadd.f32 %v335, %v556
      %558 = vmatprep.mubr.f32.mxu0 0.0
      %559 = vmatmul.mubr.f32.gmra.mxu0 %v372
      %v560 = vpop.f32.mrf.mxu0
      %v561 = vadd.f32 %v331, %v560
      %v562 = vpop.f32.mrf.mxu0
      %v563 = vadd.f32 %v335, %v562
      %564 = vmatprep.mubr.f32.mxu0 0.0
      %565 = vmatmul.mubr.f32.gmra.mxu0 %v375
      %v566 = vpop.f32.mrf.mxu0
      %v567 = vadd.f32 %v331, %v566
      %v568 = vpop.f32.mrf.mxu0
      %v569 = vadd.f32 %v335, %v568
      %570 = vmatprep.mubr.f32.mxu0 0.0
      %571 = vmatmul.mubr.f32.gmra.mxu0 %v378
      %v572 = vpop.f32.mrf.mxu0
      %v573 = vadd.f32 %v331, %v572
      %v574 = vpop.f32.mrf.mxu0
      %v575 = vadd.f32 %v335, %v574
      %576 = vmatprep.mubr.f32.mxu0 0.0
      %577 = vmatmul.mubr.f32.gmra.mxu0 %v381
      %v578 = vpop.f32.mrf.mxu0
      %v579 = vadd.f32 %v331, %v578
      %v580 = vpop.f32.mrf.mxu0
      %v581 = vadd.f32 %v335, %v580
      %582 = vmatprep.mubr.f32.mxu0 0.0
      %583 = vmatmul.mubr.f32.gmra.mxu0 %v384
      %v584 = vpop.f32.mrf.mxu0
      %v585 = vadd.f32 %v331, %v584
      %v586 = vpop.f32.mrf.mxu0
      %v587 = vadd.f32 %v335, %v586
      %588 = vmatprep.mubr.f32.mxu0 0.0
      %589 = vmatmul.mubr.f32.gmra.mxu0 %v387
      %v590 = vpop.f32.mrf.mxu0
      %v591 = vadd.f32 %v331, %v590
      %v592 = vpop.f32.mrf.mxu0
      %v593 = vadd.f32 %v335, %v592
      %594 = vmatprep.mubr.f32.mxu0 0.0
      %595 = vmatmul.mubr.f32.gmra.mxu0 %v390
      %v596 = vpop.f32.mrf.mxu0
      %v597 = vadd.f32 %v331, %v596
      %v598 = vpop.f32.mrf.mxu0
      %v599 = vadd.f32 %v335, %v598
      %600 = vmatprep.mubr.f32.mxu0 0.0
      %601 = vmatmul.mubr.f32.gmra.mxu0 %v393
      %v602 = vpop.f32.mrf.mxu0
      %v603 = vadd.f32 %v331, %v602
      %v604 = vpop.f32.mrf.mxu0
      %v605 = vadd.f32 %v335, %v604
      %606 = vmatprep.mubr.f32.mxu0 0.0
      %607 = vmatmul.mubr.f32.gmra.mxu0 %v396
      %v608 = vpop.f32.mrf.mxu0
      %v609 = vadd.f32 %v331, %v608
      %v610 = vpop.f32.mrf.mxu0
      %v611 = vadd.f32 %v335, %v610
      %612 = vmatprep.mubr.f32.mxu0 0.0
      %613 = vmatmul.mubr.f32.gmra.mxu0 %v399
      %v614 = vpop.f32.mrf.mxu0
      %v615 = vadd.f32 %v331, %v614
      %v616 = vpop.f32.mrf.mxu0
      %v617 = vadd.f32 %v335, %v616
      %618 = vmatprep.mubr.f32.mxu0 0.0
      %619 = vmatmul.mubr.f32.gmra.mxu0 %v402
      %v620 = vpop.f32.mrf.mxu0
      %v621 = vadd.f32 %v331, %v620
      %v622 = vpop.f32.mrf.mxu0
      %v623 = vadd.f32 %v335, %v622
      %624 = vmatprep.mubr.f32.mxu0 0.0
      %625 = vmatmul.mubr.f32.gmra.mxu0 %v405
      %v626 = vpop.f32.mrf.mxu0
      %v627 = vadd.f32 %v331, %v626
      %v628 = vpop.f32.mrf.mxu0
      %v629 = vadd.f32 %v335, %v628
      %630 = vmatprep.mubr.f32.mxu0 0.0
      %631 = vmatmul.mubr.f32.gmra.mxu0 %v408
      %v632 = vpop.f32.mrf.mxu0
      %v633 = vadd.f32 %v331, %v632
      %v634 = vpop.f32.mrf.mxu0
      %v635 = vadd.f32 %v335, %v634
      %636 = vmatprep.mubr.f32.mxu0 0.0
      %637 = vmatmul.mubr.f32.gmra.mxu0 %v411
      %v638 = vpop.f32.mrf.mxu0
      %v639 = vadd.f32 %v331, %v638
      %v640 = vpop.f32.mrf.mxu0
      %v641 = vadd.f32 %v335, %v640
      %642 = vmatprep.mubr.f32.mxu0 0.0
      %643 = vmatmul.mubr.f32.gmra.mxu0 %v414
      %v644 = vpop.f32.mrf.mxu0
      %v645 = vadd.f32 %v331, %v644
      %v646 = vpop.f32.mrf.mxu0
      %v647 = vadd.f32 %v335, %v646
      %648 = vmatprep.mubr.f32.mxu0 0.0
      %649 = vmatmul.mubr.f32.gmra.mxu0 %v417
      %v650 = vpop.f32.mrf.mxu0
      %v651 = vadd.f32 %v331, %v650
      %v652 = vpop.f32.mrf.mxu0
      %v653 = vadd.f32 %v335, %v652
      %654 = vmatprep.mubr.f32.mxu0 0.0
      %655 = vmatmul.mubr.f32.gmra.mxu0 %v420
      %v656 = vpop.f32.mrf.mxu0
      %v657 = vadd.f32 %v331, %v656
      %v658 = vpop.f32.mrf.mxu0
      %v659 = vadd.f32 %v335, %v658
      %660 = vmatprep.mubr.f32.mxu0 0.0
      %661 = vmatmul.mubr.f32.gmra.mxu0 %v423
      %v662 = vpop.f32.mrf.mxu0
      %v663 = vadd.f32 %v331, %v662
      %v664 = vpop.f32.mrf.mxu0
      %v665 = vadd.f32 %v335, %v664
      %666 = vmatprep.mubr.f32.mxu0 0.0
      %667 = vmatmul.mubr.f32.gmra.mxu0 %v426
      %v668 = vpop.f32.mrf.mxu0
      %v669 = vadd.f32 %v331, %v668
      %v670 = vpop.f32.mrf.mxu0
      %v671 = vadd.f32 %v335, %v670
      %672 = vmatprep.mubr.f32.mxu0 0.0
      %673 = vmatmul.mubr.f32.gmra.mxu0 %v429
      %v674 = vpop.f32.mrf.mxu0
      %v675 = vadd.f32 %v331, %v674
      %v676 = vpop.f32.mrf.mxu0
      %v677 = vadd.f32 %v335, %v676
      %678 = vmatprep.mubr.f32.mxu0 0.0
      %679 = vmatmul.mubr.f32.gmra.mxu0 %v432
      %v680 = vpop.f32.mrf.mxu0
      %v681 = vadd.f32 %v331, %v680
      %v682 = vpop.f32.mrf.mxu0
      %v683 = vadd.f32 %v335, %v682
      %684 = vmatprep.mubr.f32.mxu0 0.0
      %685 = vmatmul.mubr.f32.gmra.mxu0 %v435
      %v686 = vpop.f32.mrf.mxu0
      %v687 = vadd.f32 %v331, %v686
      %v688 = vpop.f32.mrf.mxu0
      %v689 = vadd.f32 %v335, %v688
      %690 = vmatprep.mubr.f32.mxu0 0.0
      %691 = vmatmul.mubr.f32.gmra.mxu0 %v438
      %v692 = vpop.f32.mrf.mxu0
      %v693 = vadd.f32 %v331, %v692
      %v694 = vpop.f32.mrf.mxu0
      %v695 = vadd.f32 %v335, %v694
      %696 = vdwg.mxu0
      %697 = vmatprep.subr.mxu0 0.0
      %698 = vmatpush1.msra.mxu0 0.0
      %699 = vmatprep.subr.mxu0 0.0
      %700 = vmatpush1.msra.mxu0 0.0
      %701 = vmatprep.subr.mxu0 0.0
      %702 = vmatpush1.msra.mxu0 0.0
      %703 = vmatprep.subr.mxu0 0.0
      %704 = vmatpush1.msra.mxu0 0.0
      %705 = vmatprep.subr.mxu0 0.0
      %706 = vmatpush1.msra.mxu0 0.0
      %707 = vmatprep.subr.mxu0 0.0
      %708 = vmatpush1.msra.mxu0 0.0
      %709 = vmatprep.subr.mxu0 0.0
      %710 = vmatpush1.msra.mxu0 0.0
      %711 = vmatprep.subr.mxu0 0.0
      %712 = vmatpush1.msra.mxu0 0.0
      %713 = vmatprep.subr.mxu0 0.0
      %714 = vmatpush1.msra.mxu0 0.0
      %715 = vmatprep.subr.mxu0 0.0
      %716 = vmatpush1.msra.mxu0 0.0
      %717 = vmatprep.subr.mxu0 0.0
      %718 = vmatpush1.msra.mxu0 0.0
      %719 = vmatprep.subr.mxu0 0.0
      %720 = vmatpush1.msra.mxu0 0.0
      %721 = vmatprep.subr.mxu0 0.0
      %722 = vmatpush1.msra.mxu0 %v325
      %723 = vmatprep.subr.mxu0 0.0
      %724 = vmatpush1.msra.mxu0 %v322
      %725 = vmatprep.subr.mxu0 0.0
      %726 = vmatpush1.msra.mxu0 %v319
      %727 = vmatprep.subr.mxu0 0.0
      %728 = vmatpush1.msra.mxu0 %v316
      %729 = vmatprep.subr.mxu0 0.0
      %730 = vmatpush2.msra.mxu0 0.0
      %731 = vmatprep.subr.mxu0 0.0
      %732 = vmatpush2.msra.mxu0 0.0
      %733 = vmatprep.subr.mxu0 0.0
      %734 = vmatpush2.msra.mxu0 0.0
      %735 = vmatprep.subr.mxu0 0.0
      %736 = vmatpush2.msra.mxu0 0.0
      %737 = vmatprep.subr.mxu0 0.0
      %738 = vmatpush2.msra.mxu0 0.0
      %739 = vmatprep.subr.mxu0 0.0
      %740 = vmatpush2.msra.mxu0 0.0
      %741 = vmatprep.subr.mxu0 0.0
      %742 = vmatpush2.msra.mxu0 0.0
      %743 = vmatprep.subr.mxu0 0.0
      %744 = vmatpush2.msra.mxu0 0.0
      %745 = vmatprep.subr.mxu0 0.0
      %746 = vmatpush2.msra.mxu0 0.0
      %747 = vmatprep.subr.mxu0 0.0
      %748 = vmatpush2.msra.mxu0 0.0
      %749 = vmatprep.subr.mxu0 0.0
      %750 = vmatpush2.msra.mxu0 0.0
      %751 = vmatprep.subr.mxu0 0.0
      %752 = vmatpush2.msra.mxu0 0.0
      %753 = vmatprep.subr.mxu0 0.0
      %754 = vmatpush2.msra.mxu0 0.0
      %755 = vmatprep.subr.mxu0 0.0
      %756 = vmatpush2.msra.mxu0 0.0
      %757 = vmatprep.subr.mxu0 0.0
      %758 = vmatpush2.msra.mxu0 0.0
      %759 = vmatprep.subr.mxu0 0.0
      %760 = vmatpush2.msra.mxu0 0.0
      %761 = vmatprep.mubr.f32.mxu0 0.0
      %762 = vmatmul.mubr.f32.gmra.mxu0 %v345
      %v763 = vpop.f32.mrf.mxu0
      %v764 = vadd.f32 %v339, %v763
      %v765 = vpop.f32.mrf.mxu0
      %766 = vmatprep.mubr.f32.mxu0 0.0
      %767 = vmatmul.mubr.f32.gmra.mxu0 %v348
      %v768 = vpop.f32.mrf.mxu0
      %v769 = vadd.f32 %v339, %v768
      %v770 = vpop.f32.mrf.mxu0
      %771 = vmatprep.mubr.f32.mxu0 0.0
      %772 = vmatmul.mubr.f32.gmra.mxu0 %v351
      %v773 = vpop.f32.mrf.mxu0
      %v774 = vadd.f32 %v339, %v773
      %v775 = vpop.f32.mrf.mxu0
      %776 = vmatprep.mubr.f32.mxu0 0.0
      %777 = vmatmul.mubr.f32.gmra.mxu0 %v354
      %v778 = vpop.f32.mrf.mxu0
      %v779 = vadd.f32 %v339, %v778
      %v780 = vpop.f32.mrf.mxu0
      %781 = vmatprep.mubr.f32.mxu0 0.0
      %782 = vmatmul.mubr.f32.gmra.mxu0 %v357
      %v783 = vpop.f32.mrf.mxu0
      %v784 = vadd.f32 %v339, %v783
      %v785 = vpop.f32.mrf.mxu0
      %786 = vmatprep.mubr.f32.mxu0 0.0
      %787 = vmatmul.mubr.f32.gmra.mxu0 %v360
      %v788 = vpop.f32.mrf.mxu0
      %v789 = vadd.f32 %v339, %v788
      %v790 = vpop.f32.mrf.mxu0
      %791 = vmatprep.mubr.f32.mxu0 0.0
      %792 = vmatmul.mubr.f32.gmra.mxu0 %v363
      %v793 = vpop.f32.mrf.mxu0
      %v794 = vadd.f32 %v339, %v793
      %v795 = vpop.f32.mrf.mxu0
      %796 = vmatprep.mubr.f32.mxu0 0.0
      %797 = vmatmul.mubr.f32.gmra.mxu0 %v366
      %v798 = vpop.f32.mrf.mxu0
      %v799 = vadd.f32 %v339, %v798
      %v800 = vpop.f32.mrf.mxu0
      %801 = vmatprep.mubr.f32.mxu0 0.0
      %802 = vmatmul.mubr.f32.gmra.mxu0 %v369
      %v803 = vpop.f32.mrf.mxu0
      %v804 = vadd.f32 %v339, %v803
      %v805 = vpop.f32.mrf.mxu0
      %806 = vmatprep.mubr.f32.mxu0 0.0
      %807 = vmatmul.mubr.f32.gmra.mxu0 %v372
      %v808 = vpop.f32.mrf.mxu0
      %v809 = vadd.f32 %v339, %v808
      %v810 = vpop.f32.mrf.mxu0
      %811 = vmatprep.mubr.f32.mxu0 0.0
      %812 = vmatmul.mubr.f32.gmra.mxu0 %v375
      %v813 = vpop.f32.mrf.mxu0
      %v814 = vadd.f32 %v339, %v813
      %v815 = vpop.f32.mrf.mxu0
      %816 = vmatprep.mubr.f32.mxu0 0.0
      %817 = vmatmul.mubr.f32.gmra.mxu0 %v378
      %v818 = vpop.f32.mrf.mxu0
      %v819 = vadd.f32 %v339, %v818
      %v820 = vpop.f32.mrf.mxu0
      %821 = vmatprep.mubr.f32.mxu0 0.0
      %822 = vmatmul.mubr.f32.gmra.mxu0 %v381
      %v823 = vpop.f32.mrf.mxu0
      %v824 = vadd.f32 %v339, %v823
      %v825 = vpop.f32.mrf.mxu0
      %826 = vmatprep.mubr.f32.mxu0 0.0
      %827 = vmatmul.mubr.f32.gmra.mxu0 %v384
      %v828 = vpop.f32.mrf.mxu0
      %v829 = vadd.f32 %v339, %v828
      %v830 = vpop.f32.mrf.mxu0
      %831 = vmatprep.mubr.f32.mxu0 0.0
      %832 = vmatmul.mubr.f32.gmra.mxu0 %v387
      %v833 = vpop.f32.mrf.mxu0
      %v834 = vadd.f32 %v339, %v833
      %v835 = vpop.f32.mrf.mxu0
      %836 = vmatprep.mubr.f32.mxu0 0.0
      %837 = vmatmul.mubr.f32.gmra.mxu0 %v390
      %v838 = vpop.f32.mrf.mxu0
      %v839 = vadd.f32 %v339, %v838
      %v840 = vpop.f32.mrf.mxu0
      %841 = vmatprep.mubr.f32.mxu0 0.0
      %842 = vmatmul.mubr.f32.gmra.mxu0 %v393
      %v843 = vpop.f32.mrf.mxu0
      %v844 = vadd.f32 %v339, %v843
      %v845 = vpop.f32.mrf.mxu0
      %846 = vmatprep.mubr.f32.mxu0 0.0
      %847 = vmatmul.mubr.f32.gmra.mxu0 %v396
      %v848 = vpop.f32.mrf.mxu0
      %v849 = vadd.f32 %v339, %v848
      %v850 = vpop.f32.mrf.mxu0
      %851 = vmatprep.mubr.f32.mxu0 0.0
      %852 = vmatmul.mubr.f32.gmra.mxu0 %v399
      %v853 = vpop.f32.mrf.mxu0
      %v854 = vadd.f32 %v339, %v853
      %v855 = vpop.f32.mrf.mxu0
      %856 = vmatprep.mubr.f32.mxu0 0.0
      %857 = vmatmul.mubr.f32.gmra.mxu0 %v402
      %v858 = vpop.f32.mrf.mxu0
      %v859 = vadd.f32 %v339, %v858
      %v860 = vpop.f32.mrf.mxu0
      %861 = vmatprep.mubr.f32.mxu0 0.0
      %862 = vmatmul.mubr.f32.gmra.mxu0 %v405
      %v863 = vpop.f32.mrf.mxu0
      %v864 = vadd.f32 %v339, %v863
      %v865 = vpop.f32.mrf.mxu0
      %866 = vmatprep.mubr.f32.mxu0 0.0
      %867 = vmatmul.mubr.f32.gmra.mxu0 %v408
      %v868 = vpop.f32.mrf.mxu0
      %v869 = vadd.f32 %v339, %v868
      %v870 = vpop.f32.mrf.mxu0
      %871 = vmatprep.mubr.f32.mxu0 0.0
      %872 = vmatmul.mubr.f32.gmra.mxu0 %v411
      %v873 = vpop.f32.mrf.mxu0
      %v874 = vadd.f32 %v339, %v873
      %v875 = vpop.f32.mrf.mxu0
      %876 = vmatprep.mubr.f32.mxu0 0.0
      %877 = vmatmul.mubr.f32.gmra.mxu0 %v414
      %v878 = vpop.f32.mrf.mxu0
      %v879 = vadd.f32 %v339, %v878
      %v880 = vpop.f32.mrf.mxu0
      %881 = vmatprep.mubr.f32.mxu0 0.0
      %882 = vmatmul.mubr.f32.gmra.mxu0 %v417
      %v883 = vpop.f32.mrf.mxu0
      %v884 = vadd.f32 %v339, %v883
      %v885 = vpop.f32.mrf.mxu0
      %886 = vmatprep.mubr.f32.mxu0 0.0
      %887 = vmatmul.mubr.f32.gmra.mxu0 %v420
      %v888 = vpop.f32.mrf.mxu0
      %v889 = vadd.f32 %v339, %v888
      %v890 = vpop.f32.mrf.mxu0
      %891 = vmatprep.mubr.f32.mxu0 0.0
      %892 = vmatmul.mubr.f32.gmra.mxu0 %v423
      %v893 = vpop.f32.mrf.mxu0
      %v894 = vadd.f32 %v339, %v893
      %v895 = vpop.f32.mrf.mxu0
      %896 = vmatprep.mubr.f32.mxu0 0.0
      %897 = vmatmul.mubr.f32.gmra.mxu0 %v426
      %v898 = vpop.f32.mrf.mxu0
      %v899 = vadd.f32 %v339, %v898
      %v900 = vpop.f32.mrf.mxu0
      %901 = vmatprep.mubr.f32.mxu0 0.0
      %902 = vmatmul.mubr.f32.gmra.mxu0 %v429
      %v903 = vpop.f32.mrf.mxu0
      %v904 = vadd.f32 %v339, %v903
      %v905 = vpop.f32.mrf.mxu0
      %906 = vmatprep.mubr.f32.mxu0 0.0
      %907 = vmatmul.mubr.f32.gmra.mxu0 %v432
      %v908 = vpop.f32.mrf.mxu0
      %v909 = vadd.f32 %v339, %v908
      %v910 = vpop.f32.mrf.mxu0
      %911 = vmatprep.mubr.f32.mxu0 0.0
      %912 = vmatmul.mubr.f32.gmra.mxu0 %v435
      %v913 = vpop.f32.mrf.mxu0
      %v914 = vadd.f32 %v339, %v913
      %v915 = vpop.f32.mrf.mxu0
      %916 = vmatprep.mubr.f32.mxu0 0.0
      %917 = vmatmul.mubr.f32.gmra.mxu0 %v438
      %v918 = vpop.f32.mrf.mxu0
      %v919 = vadd.f32 %v339, %v918
      %v920 = vpop.f32.mrf.mxu0
      %921 = vdwg.mxu0
      %v922 = vmax.f32 %v507, 0.0
      %v923 = vmax.f32 %v509, 0.0
      %v924 = vmax.f32 %v764, 0.0
      %v925 = vmax.f32 %v513, 0.0
      %v926 = vmax.f32 %v515, 0.0
      %v927 = vmax.f32 %v769, 0.0
      %v928 = vmax.f32 %v519, 0.0
      %v929 = vmax.f32 %v521, 0.0
      %v930 = vmax.f32 %v774, 0.0
      %v931 = vmax.f32 %v525, 0.0
      %v932 = vmax.f32 %v527, 0.0
      %v933 = vmax.f32 %v779, 0.0
      %v934 = vmax.f32 %v531, 0.0
      %v935 = vmax.f32 %v533, 0.0
      %v936 = vmax.f32 %v784, 0.0
      %v937 = vmax.f32 %v537, 0.0
      %v938 = vmax.f32 %v539, 0.0
      %v939 = vmax.f32 %v789, 0.0
      %v940 = vmax.f32 %v543, 0.0
      %v941 = vmax.f32 %v545, 0.0
      %v942 = vmax.f32 %v794, 0.0
      %v943 = vmax.f32 %v549, 0.0
      %v944 = vmax.f32 %v551, 0.0
      %v945 = vmax.f32 %v799, 0.0
      %v946 = vmax.f32 %v555, 0.0
      %v947 = vmax.f32 %v557, 0.0
      %v948 = vmax.f32 %v804, 0.0
      %v949 = vmax.f32 %v561, 0.0
      %v950 = vmax.f32 %v563, 0.0
      %v951 = vmax.f32 %v809, 0.0
      %v952 = vmax.f32 %v567, 0.0
      %v953 = vmax.f32 %v569, 0.0
      %v954 = vmax.f32 %v814, 0.0
      %v955 = vmax.f32 %v573, 0.0
      %v956 = vmax.f32 %v575, 0.0
      %v957 = vmax.f32 %v819, 0.0
      %v958 = vmax.f32 %v579, 0.0
      %v959 = vmax.f32 %v581, 0.0
      %v960 = vmax.f32 %v824, 0.0
      %v961 = vmax.f32 %v585, 0.0
      %v962 = vmax.f32 %v587, 0.0
      %v963 = vmax.f32 %v829, 0.0
      %v964 = vmax.f32 %v591, 0.0
      %v965 = vmax.f32 %v593, 0.0
      %v966 = vmax.f32 %v834, 0.0
      %v967 = vmax.f32 %v597, 0.0
      %v968 = vmax.f32 %v599, 0.0
      %v969 = vmax.f32 %v839, 0.0
      %v970 = vmax.f32 %v603, 0.0
      %v971 = vmax.f32 %v605, 0.0
      %v972 = vmax.f32 %v844, 0.0
      %v973 = vmax.f32 %v609, 0.0
      %v974 = vmax.f32 %v611, 0.0
      %v975 = vmax.f32 %v849, 0.0
      %v976 = vmax.f32 %v615, 0.0
      %v977 = vmax.f32 %v617, 0.0
      %v978 = vmax.f32 %v854, 0.0
      %v979 = vmax.f32 %v621, 0.0
      %v980 = vmax.f32 %v623, 0.0
      %v981 = vmax.f32 %v859, 0.0
      %v982 = vmax.f32 %v627, 0.0
      %v983 = vmax.f32 %v629, 0.0
      %v984 = vmax.f32 %v864, 0.0
      %v985 = vmax.f32 %v633, 0.0
      %v986 = vmax.f32 %v635, 0.0
      %v987 = vmax.f32 %v869, 0.0
      %v988 = vmax.f32 %v639, 0.0
      %v989 = vmax.f32 %v641, 0.0
      %v990 = vmax.f32 %v874, 0.0
      %v991 = vmax.f32 %v645, 0.0
      %v992 = vmax.f32 %v647, 0.0
      %v993 = vmax.f32 %v879, 0.0
      %v994 = vmax.f32 %v651, 0.0
      %v995 = vmax.f32 %v653, 0.0
      %v996 = vmax.f32 %v884, 0.0
      %v997 = vmax.f32 %v657, 0.0
      %v998 = vmax.f32 %v659, 0.0
      %v999 = vmax.f32 %v889, 0.0
      %v1000 = vmax.f32 %v663, 0.0
      %v1001 = vmax.f32 %v665, 0.0
      %v1002 = vmax.f32 %v894, 0.0
      %v1003 = vmax.f32 %v669, 0.0
      %v1004 = vmax.f32 %v671, 0.0
      %v1005 = vmax.f32 %v899, 0.0
      %v1006 = vmax.f32 %v675, 0.0
      %v1007 = vmax.f32 %v677, 0.0
      %v1008 = vmax.f32 %v904, 0.0
      %v1009 = vmax.f32 %v681, 0.0
      %v1010 = vmax.f32 %v683, 0.0
      %v1011 = vmax.f32 %v909, 0.0
      %v1012 = vmax.f32 %v687, 0.0
      %v1013 = vmax.f32 %v689, 0.0
      %v1014 = vmax.f32 %v914, 0.0
      %v1015 = vmax.f32 %v693, 0.0
      %v1016 = vmax.f32 %v695, 0.0
      %v1017 = vmax.f32 %v919, 0.0
      %v1018 = vld [vmem:[%s3] sm:$0xff]
      %v1019 = vld [vmem:[%s3 + $0x8] sm:$0xff]
      %v1020 = vld [vmem:[%s3 + $0x10] sm:$0xff]
      %v1021 = vld [vmem:[%s3 + $0x18] sm:$0xff]
      %v1022 = vld [vmem:[%s3 + $0x20] sm:$0xff]
      %v1023 = vld [vmem:[%s3 + $0x28] sm:$0xff]
      %v1024 = vld [vmem:[%s3 + $0x30] sm:$0xff]
      %v1025 = vld [vmem:[%s3 + $0x38] sm:$0xff]
      %v1026 = vld [vmem:[%s3 + $0x40] sm:$0xff]
      %v1027 = vld [vmem:[%s3 + $0x48] sm:$0xff]
      %v1028 = vld [vmem:[%s3 + $0x50] sm:$0xff]
      %v1029 = vld [vmem:[%s3 + $0x58] sm:$0xff]
      %v1030 = vld [vmem:[%s3 + $0x60] sm:$0xff]
      %v1031 = vld [vmem:[%s3 + $0x68] sm:$0xff]
      %v1032 = vld [vmem:[%s3 + $0x70] sm:$0xff]
      %v1033 = vld [vmem:[%s3 + $0x78] sm:$0xff]
      %v1034 = vld [vmem:[%s3 + $0x80] sm:$0xff]
      %v1035 = vld [vmem:[%s3 + $0x88] sm:$0xff]
      %v1036 = vld [vmem:[%s3 + $0x90] sm:$0xff]
      %v1037 = vld [vmem:[%s3 + $0x98] sm:$0xff]
      %v1038 = vld [vmem:[%s3 + $0xa0] sm:$0xff]
      %v1039 = vld [vmem:[%s3 + $0xa8] sm:$0xff]
      %v1040 = vld [vmem:[%s3 + $0xb0] sm:$0xff]
      %v1041 = vld [vmem:[%s3 + $0xb8] sm:$0xff]
      %v1042 = vld [vmem:[%s3 + $0xc0] sm:$0xff]
      %v1043 = vld [vmem:[%s3 + $0xc8] sm:$0xff]
      %v1044 = vld [vmem:[%s3 + $0xd0] sm:$0xff]
      %v1045 = vld [vmem:[%s3 + $0xd8] sm:$0xff]
      %v1046 = vld [vmem:[%s3 + $0xe0] sm:$0xff]
      %v1047 = vld [vmem:[%s3 + $0xe8] sm:$0xff]
      %v1048 = vld [vmem:[%s3 + $0xf0] sm:$0xff]
      %v1049 = vld [vmem:[%s3 + $0xf8] sm:$0xff]
      %v1050 = vld [vmem:[%s3 + $0x100] sm:$0xff]
      %v1051 = vld [vmem:[%s3 + $0x108] sm:$0xff]
      %v1052 = vld [vmem:[%s3 + $0x110] sm:$0xff]
      %v1053 = vld [vmem:[%s3 + $0x118] sm:$0xff]
      %v1054 = vld [vmem:[%s3 + $0x120] sm:$0xff]
      %v1055 = vld [vmem:[%s3 + $0x128] sm:$0xff]
      %v1056 = vld [vmem:[%s3 + $0x130] sm:$0xff]
      %v1057 = vld [vmem:[%s3 + $0x138] sm:$0xff]
      %v1058 = vld [vmem:[%s3 + $0x140] sm:$0xff]
      %v1059 = vld [vmem:[%s3 + $0x148] sm:$0xff]
      %v1060 = vld [vmem:[%s3 + $0x150] sm:$0xff]
      %v1061 = vld [vmem:[%s3 + $0x158] sm:$0xff]
      %v1062 = vld [vmem:[%s3 + $0x160] sm:$0xff]
      %v1063 = vld [vmem:[%s3 + $0x168] sm:$0xff]
      %v1064 = vld [vmem:[%s3 + $0x170] sm:$0xff]
      %v1065 = vld [vmem:[%s3 + $0x178] sm:$0xff]
      %v1066 = vld [vmem:[%s4] sm:$0x1]
      %v1068 = vlaneseq
      %v1069 = vshrl.u32 %v1068, 7
      %v1070 = vsub.s32 0, %v1069
      %v1071 = vrot.slane %v1066, %v1070
      %1073 = vmatprep.subr.mxu0 0.0
      %1074 = vmatpush1.msra.mxu0 %v1033
      %1075 = vmatprep.subr.mxu0 0.0
      %1076 = vmatpush1.msra.mxu0 %v1032
      %1077 = vmatprep.subr.mxu0 0.0
      %1078 = vmatpush1.msra.mxu0 %v1031
      %1079 = vmatprep.subr.mxu0 0.0
      %1080 = vmatpush1.msra.mxu0 %v1030
      %1081 = vmatprep.subr.mxu0 0.0
      %1082 = vmatpush1.msra.mxu0 %v1029
      %1083 = vmatprep.subr.mxu0 0.0
      %1084 = vmatpush1.msra.mxu0 %v1028
      %1085 = vmatprep.subr.mxu0 0.0
      %1086 = vmatpush1.msra.mxu0 %v1027
      %1087 = vmatprep.subr.mxu0 0.0
      %1088 = vmatpush1.msra.mxu0 %v1026
      %1089 = vmatprep.subr.mxu0 0.0
      %1090 = vmatpush1.msra.mxu0 %v1025
      %1091 = vmatprep.subr.mxu0 0.0
      %1092 = vmatpush1.msra.mxu0 %v1024
      %1093 = vmatprep.subr.mxu0 0.0
      %1094 = vmatpush1.msra.mxu0 %v1023
      %1095 = vmatprep.subr.mxu0 0.0
      %1096 = vmatpush1.msra.mxu0 %v1022
      %1097 = vmatprep.subr.mxu0 0.0
      %1098 = vmatpush1.msra.mxu0 %v1021
      %1099 = vmatprep.subr.mxu0 0.0
      %1100 = vmatpush1.msra.mxu0 %v1020
      %1101 = vmatprep.subr.mxu0 0.0
      %1102 = vmatpush1.msra.mxu0 %v1019
      %1103 = vmatprep.subr.mxu0 0.0
      %1104 = vmatpush1.msra.mxu0 %v1018
      %1105 = vmatprep.subr.mxu0 0.0
      %1106 = vmatpush2.msra.mxu0 %v1049
      %1107 = vmatprep.subr.mxu0 0.0
      %1108 = vmatpush2.msra.mxu0 %v1048
      %1109 = vmatprep.subr.mxu0 0.0
      %1110 = vmatpush2.msra.mxu0 %v1047
      %1111 = vmatprep.subr.mxu0 0.0
      %1112 = vmatpush2.msra.mxu0 %v1046
      %1113 = vmatprep.subr.mxu0 0.0
      %1114 = vmatpush2.msra.mxu0 %v1045
      %1115 = vmatprep.subr.mxu0 0.0
      %1116 = vmatpush2.msra.mxu0 %v1044
      %1117 = vmatprep.subr.mxu0 0.0
      %1118 = vmatpush2.msra.mxu0 %v1043
      %1119 = vmatprep.subr.mxu0 0.0
      %1120 = vmatpush2.msra.mxu0 %v1042
      %1121 = vmatprep.subr.mxu0 0.0
      %1122 = vmatpush2.msra.mxu0 %v1041
      %1123 = vmatprep.subr.mxu0 0.0
      %1124 = vmatpush2.msra.mxu0 %v1040
      %1125 = vmatprep.subr.mxu0 0.0
      %1126 = vmatpush2.msra.mxu0 %v1039
      %1127 = vmatprep.subr.mxu0 0.0
      %1128 = vmatpush2.msra.mxu0 %v1038
      %1129 = vmatprep.subr.mxu0 0.0
      %1130 = vmatpush2.msra.mxu0 %v1037
      %1131 = vmatprep.subr.mxu0 0.0
      %1132 = vmatpush2.msra.mxu0 %v1036
      %1133 = vmatprep.subr.mxu0 0.0
      %1134 = vmatpush2.msra.mxu0 %v1035
      %1135 = vmatprep.subr.mxu0 0.0
      %1136 = vmatpush2.msra.mxu0 %v1034
      %1137 = vmatprep.mubr.f32.mxu0 %v923
      %1138 = vmatmul.mubr.f32.gmra.mxu0 %v922
      %v1139 = vpop.f32.mrf.mxu0
      %v1140 = vadd.f32 %v1071, %v1139
      %v1141 = vpop.f32.mrf.mxu0
      %1142 = vmatprep.mubr.f32.mxu0 %v926
      %1143 = vmatmul.mubr.f32.gmra.mxu0 %v925
      %v1144 = vpop.f32.mrf.mxu0
      %v1145 = vadd.f32 %v1071, %v1144
      %v1146 = vpop.f32.mrf.mxu0
      %1147 = vmatprep.mubr.f32.mxu0 %v929
      %1148 = vmatmul.mubr.f32.gmra.mxu0 %v928
      %v1149 = vpop.f32.mrf.mxu0
      %v1150 = vadd.f32 %v1071, %v1149
      %v1151 = vpop.f32.mrf.mxu0
      %1152 = vmatprep.mubr.f32.mxu0 %v932
      %1153 = vmatmul.mubr.f32.gmra.mxu0 %v931
      %v1154 = vpop.f32.mrf.mxu0
      %v1155 = vadd.f32 %v1071, %v1154
      %v1156 = vpop.f32.mrf.mxu0
      %1157 = vmatprep.mubr.f32.mxu0 %v935
      %1158 = vmatmul.mubr.f32.gmra.mxu0 %v934
      %v1159 = vpop.f32.mrf.mxu0
      %v1160 = vadd.f32 %v1071, %v1159
      %v1161 = vpop.f32.mrf.mxu0
      %1162 = vmatprep.mubr.f32.mxu0 %v938
      %1163 = vmatmul.mubr.f32.gmra.mxu0 %v937
      %v1164 = vpop.f32.mrf.mxu0
      %v1165 = vadd.f32 %v1071, %v1164
      %v1166 = vpop.f32.mrf.mxu0
      %1167 = vmatprep.mubr.f32.mxu0 %v941
      %1168 = vmatmul.mubr.f32.gmra.mxu0 %v940
      %v1169 = vpop.f32.mrf.mxu0
      %v1170 = vadd.f32 %v1071, %v1169
      %v1171 = vpop.f32.mrf.mxu0
      %1172 = vmatprep.mubr.f32.mxu0 %v944
      %1173 = vmatmul.mubr.f32.gmra.mxu0 %v943
      %v1174 = vpop.f32.mrf.mxu0
      %v1175 = vadd.f32 %v1071, %v1174
      %v1176 = vpop.f32.mrf.mxu0
      %1177 = vmatprep.mubr.f32.mxu0 %v947
      %1178 = vmatmul.mubr.f32.gmra.mxu0 %v946
      %v1179 = vpop.f32.mrf.mxu0
      %v1180 = vadd.f32 %v1071, %v1179
      %v1181 = vpop.f32.mrf.mxu0
      %1182 = vmatprep.mubr.f32.mxu0 %v950
      %1183 = vmatmul.mubr.f32.gmra.mxu0 %v949
      %v1184 = vpop.f32.mrf.mxu0
      %v1185 = vadd.f32 %v1071, %v1184
      %v1186 = vpop.f32.mrf.mxu0
      %1187 = vmatprep.mubr.f32.mxu0 %v953
      %1188 = vmatmul.mubr.f32.gmra.mxu0 %v952
      %v1189 = vpop.f32.mrf.mxu0
      %v1190 = vadd.f32 %v1071, %v1189
      %v1191 = vpop.f32.mrf.mxu0
      %1192 = vmatprep.mubr.f32.mxu0 %v956
      %1193 = vmatmul.mubr.f32.gmra.mxu0 %v955
      %v1194 = vpop.f32.mrf.mxu0
      %v1195 = vadd.f32 %v1071, %v1194
      %v1196 = vpop.f32.mrf.mxu0
      %1197 = vmatprep.mubr.f32.mxu0 %v959
      %1198 = vmatmul.mubr.f32.gmra.mxu0 %v958
      %v1199 = vpop.f32.mrf.mxu0
      %v1200 = vadd.f32 %v1071, %v1199
      %v1201 = vpop.f32.mrf.mxu0
      %1202 = vmatprep.mubr.f32.mxu0 %v962
      %1203 = vmatmul.mubr.f32.gmra.mxu0 %v961
      %v1204 = vpop.f32.mrf.mxu0
      %v1205 = vadd.f32 %v1071, %v1204
      %v1206 = vpop.f32.mrf.mxu0
      %1207 = vmatprep.mubr.f32.mxu0 %v965
      %1208 = vmatmul.mubr.f32.gmra.mxu0 %v964
      %v1209 = vpop.f32.mrf.mxu0
      %v1210 = vadd.f32 %v1071, %v1209
      %v1211 = vpop.f32.mrf.mxu0
      %1212 = vmatprep.mubr.f32.mxu0 %v968
      %1213 = vmatmul.mubr.f32.gmra.mxu0 %v967
      %v1214 = vpop.f32.mrf.mxu0
      %v1215 = vadd.f32 %v1071, %v1214
      %v1216 = vpop.f32.mrf.mxu0
      %1217 = vmatprep.mubr.f32.mxu0 %v971
      %1218 = vmatmul.mubr.f32.gmra.mxu0 %v970
      %v1219 = vpop.f32.mrf.mxu0
      %v1220 = vadd.f32 %v1071, %v1219
      %v1221 = vpop.f32.mrf.mxu0
      %1222 = vmatprep.mubr.f32.mxu0 %v974
      %1223 = vmatmul.mubr.f32.gmra.mxu0 %v973
      %v1224 = vpop.f32.mrf.mxu0
      %v1225 = vadd.f32 %v1071, %v1224
      %v1226 = vpop.f32.mrf.mxu0
      %1227 = vmatprep.mubr.f32.mxu0 %v977
      %1228 = vmatmul.mubr.f32.gmra.mxu0 %v976
      %v1229 = vpop.f32.mrf.mxu0
      %v1230 = vadd.f32 %v1071, %v1229
      %v1231 = vpop.f32.mrf.mxu0
      %1232 = vmatprep.mubr.f32.mxu0 %v980
      %1233 = vmatmul.mubr.f32.gmra.mxu0 %v979
      %v1234 = vpop.f32.mrf.mxu0
      %v1235 = vadd.f32 %v1071, %v1234
      %v1236 = vpop.f32.mrf.mxu0
      %1237 = vmatprep.mubr.f32.mxu0 %v983
      %1238 = vmatmul.mubr.f32.gmra.mxu0 %v982
      %v1239 = vpop.f32.mrf.mxu0
      %v1240 = vadd.f32 %v1071, %v1239
      %v1241 = vpop.f32.mrf.mxu0
      %1242 = vmatprep.mubr.f32.mxu0 %v986
      %1243 = vmatmul.mubr.f32.gmra.mxu0 %v985
      %v1244 = vpop.f32.mrf.mxu0
      %v1245 = vadd.f32 %v1071, %v1244
      %v1246 = vpop.f32.mrf.mxu0
      %1247 = vmatprep.mubr.f32.mxu0 %v989
      %1248 = vmatmul.mubr.f32.gmra.mxu0 %v988
      %v1249 = vpop.f32.mrf.mxu0
      %v1250 = vadd.f32 %v1071, %v1249
      %v1251 = vpop.f32.mrf.mxu0
      %1252 = vmatprep.mubr.f32.mxu0 %v992
      %1253 = vmatmul.mubr.f32.gmra.mxu0 %v991
      %v1254 = vpop.f32.mrf.mxu0
      %v1255 = vadd.f32 %v1071, %v1254
      %v1256 = vpop.f32.mrf.mxu0
      %1257 = vmatprep.mubr.f32.mxu0 %v995
      %1258 = vmatmul.mubr.f32.gmra.mxu0 %v994
      %v1259 = vpop.f32.mrf.mxu0
      %v1260 = vadd.f32 %v1071, %v1259
      %v1261 = vpop.f32.mrf.mxu0
      %1262 = vmatprep.mubr.f32.mxu0 %v998
      %1263 = vmatmul.mubr.f32.gmra.mxu0 %v997
      %v1264 = vpop.f32.mrf.mxu0
      %v1265 = vadd.f32 %v1071, %v1264
      %v1266 = vpop.f32.mrf.mxu0
      %1267 = vmatprep.mubr.f32.mxu0 %v1001
      %1268 = vmatmul.mubr.f32.gmra.mxu0 %v1000
      %v1269 = vpop.f32.mrf.mxu0
      %v1270 = vadd.f32 %v1071, %v1269
      %v1271 = vpop.f32.mrf.mxu0
      %1272 = vmatprep.mubr.f32.mxu0 %v1004
      %1273 = vmatmul.mubr.f32.gmra.mxu0 %v1003
      %v1274 = vpop.f32.mrf.mxu0
      %v1275 = vadd.f32 %v1071, %v1274
      %v1276 = vpop.f32.mrf.mxu0
      %1277 = vmatprep.mubr.f32.mxu0 %v1007
      %1278 = vmatmul.mubr.f32.gmra.mxu0 %v1006
      %v1279 = vpop.f32.mrf.mxu0
      %v1280 = vadd.f32 %v1071, %v1279
      %v1281 = vpop.f32.mrf.mxu0
      %1282 = vmatprep.mubr.f32.mxu0 %v1010
      %1283 = vmatmul.mubr.f32.gmra.mxu0 %v1009
      %v1284 = vpop.f32.mrf.mxu0
      %v1285 = vadd.f32 %v1071, %v1284
      %v1286 = vpop.f32.mrf.mxu0
      %1287 = vmatprep.mubr.f32.mxu0 %v1013
      %1288 = vmatmul.mubr.f32.gmra.mxu0 %v1012
      %v1289 = vpop.f32.mrf.mxu0
      %v1290 = vadd.f32 %v1071, %v1289
      %v1291 = vpop.f32.mrf.mxu0
      %1292 = vmatprep.mubr.f32.mxu0 %v1016
      %1293 = vmatmul.mubr.f32.gmra.mxu0 %v1015
      %v1294 = vpop.f32.mrf.mxu0
      %v1295 = vadd.f32 %v1071, %v1294
      %v1296 = vpop.f32.mrf.mxu0
      %1297 = vdwg.mxu0
      %1298 = vmatprep.subr.mxu0 0.0
      %1299 = vmatpush1.msra.mxu0 %v1065
      %1300 = vmatprep.subr.mxu0 0.0
      %1301 = vmatpush1.msra.mxu0 %v1064
      %1302 = vmatprep.subr.mxu0 0.0
      %1303 = vmatpush1.msra.mxu0 %v1063
      %1304 = vmatprep.subr.mxu0 0.0
      %1305 = vmatpush1.msra.mxu0 %v1062
      %1306 = vmatprep.subr.mxu0 0.0
      %1307 = vmatpush1.msra.mxu0 %v1061
      %1308 = vmatprep.subr.mxu0 0.0
      %1309 = vmatpush1.msra.mxu0 %v1060
      %1310 = vmatprep.subr.mxu0 0.0
      %1311 = vmatpush1.msra.mxu0 %v1059
      %1312 = vmatprep.subr.mxu0 0.0
      %1313 = vmatpush1.msra.mxu0 %v1058
      %1314 = vmatprep.subr.mxu0 0.0
      %1315 = vmatpush1.msra.mxu0 %v1057
      %1316 = vmatprep.subr.mxu0 0.0
      %1317 = vmatpush1.msra.mxu0 %v1056
      %1318 = vmatprep.subr.mxu0 0.0
      %1319 = vmatpush1.msra.mxu0 %v1055
      %1320 = vmatprep.subr.mxu0 0.0
      %1321 = vmatpush1.msra.mxu0 %v1054
      %1322 = vmatprep.subr.mxu0 0.0
      %1323 = vmatpush1.msra.mxu0 %v1053
      %1324 = vmatprep.subr.mxu0 0.0
      %1325 = vmatpush1.msra.mxu0 %v1052
      %1326 = vmatprep.subr.mxu0 0.0
      %1327 = vmatpush1.msra.mxu0 %v1051
      %1328 = vmatprep.subr.mxu0 0.0
      %1329 = vmatpush1.msra.mxu0 %v1050
      %1330 = vmatprep.subr.mxu0 0.0
      %1331 = vmatpush2.msra.mxu0 0.0
      %1332 = vmatprep.subr.mxu0 0.0
      %1333 = vmatpush2.msra.mxu0 0.0
      %1334 = vmatprep.subr.mxu0 0.0
      %1335 = vmatpush2.msra.mxu0 0.0
      %1336 = vmatprep.subr.mxu0 0.0
      %1337 = vmatpush2.msra.mxu0 0.0
      %1338 = vmatprep.subr.mxu0 0.0
      %1339 = vmatpush2.msra.mxu0 0.0
      %1340 = vmatprep.subr.mxu0 0.0
      %1341 = vmatpush2.msra.mxu0 0.0
      %1342 = vmatprep.subr.mxu0 0.0
      %1343 = vmatpush2.msra.mxu0 0.0
      %1344 = vmatprep.subr.mxu0 0.0
      %1345 = vmatpush2.msra.mxu0 0.0
      %1346 = vmatprep.subr.mxu0 0.0
      %1347 = vmatpush2.msra.mxu0 0.0
      %1348 = vmatprep.subr.mxu0 0.0
      %1349 = vmatpush2.msra.mxu0 0.0
      %1350 = vmatprep.subr.mxu0 0.0
      %1351 = vmatpush2.msra.mxu0 0.0
      %1352 = vmatprep.subr.mxu0 0.0
      %1353 = vmatpush2.msra.mxu0 0.0
      %1354 = vmatprep.subr.mxu0 0.0
      %1355 = vmatpush2.msra.mxu0 0.0
      %1356 = vmatprep.subr.mxu0 0.0
      %1357 = vmatpush2.msra.mxu0 0.0
      %1358 = vmatprep.subr.mxu0 0.0
      %1359 = vmatpush2.msra.mxu0 0.0
      %1360 = vmatprep.subr.mxu0 0.0
      %1361 = vmatpush2.msra.mxu0 0.0
      %1362 = vmatprep.mubr.f32.mxu0 0.0
      %1363 = vmatmul.mubr.f32.gmra.mxu0 %v924
      %v1364 = vpop.f32.mrf.mxu0
      %v1365 = vadd.f32 %v1140, %v1364
      %v1366 = vpop.f32.mrf.mxu0
      %1367 = vmatprep.mubr.f32.mxu0 0.0
      %1368 = vmatmul.mubr.f32.gmra.mxu0 %v927
      %v1369 = vpop.f32.mrf.mxu0
      %v1370 = vadd.f32 %v1145, %v1369
      %v1371 = vpop.f32.mrf.mxu0
      %1372 = vmatprep.mubr.f32.mxu0 0.0
      %1373 = vmatmul.mubr.f32.gmra.mxu0 %v930
      %v1374 = vpop.f32.mrf.mxu0
      %v1375 = vadd.f32 %v1150, %v1374
      %v1376 = vpop.f32.mrf.mxu0
      %1377 = vmatprep.mubr.f32.mxu0 0.0
      %1378 = vmatmul.mubr.f32.gmra.mxu0 %v933
      %v1379 = vpop.f32.mrf.mxu0
      %v1380 = vadd.f32 %v1155, %v1379
      %v1381 = vpop.f32.mrf.mxu0
      %1382 = vmatprep.mubr.f32.mxu0 0.0
      %1383 = vmatmul.mubr.f32.gmra.mxu0 %v936
      %v1384 = vpop.f32.mrf.mxu0
      %v1385 = vadd.f32 %v1160, %v1384
      %v1386 = vpop.f32.mrf.mxu0
      %1387 = vmatprep.mubr.f32.mxu0 0.0
      %1388 = vmatmul.mubr.f32.gmra.mxu0 %v939
      %v1389 = vpop.f32.mrf.mxu0
      %v1390 = vadd.f32 %v1165, %v1389
      %v1391 = vpop.f32.mrf.mxu0
      %1392 = vmatprep.mubr.f32.mxu0 0.0
      %1393 = vmatmul.mubr.f32.gmra.mxu0 %v942
      %v1394 = vpop.f32.mrf.mxu0
      %v1395 = vadd.f32 %v1170, %v1394
      %v1396 = vpop.f32.mrf.mxu0
      %1397 = vmatprep.mubr.f32.mxu0 0.0
      %1398 = vmatmul.mubr.f32.gmra.mxu0 %v945
      %v1399 = vpop.f32.mrf.mxu0
      %v1400 = vadd.f32 %v1175, %v1399
      %v1401 = vpop.f32.mrf.mxu0
      %1402 = vmatprep.mubr.f32.mxu0 0.0
      %1403 = vmatmul.mubr.f32.gmra.mxu0 %v948
      %v1404 = vpop.f32.mrf.mxu0
      %v1405 = vadd.f32 %v1180, %v1404
      %v1406 = vpop.f32.mrf.mxu0
      %1407 = vmatprep.mubr.f32.mxu0 0.0
      %1408 = vmatmul.mubr.f32.gmra.mxu0 %v951
      %v1409 = vpop.f32.mrf.mxu0
      %v1410 = vadd.f32 %v1185, %v1409
      %v1411 = vpop.f32.mrf.mxu0
      %1412 = vmatprep.mubr.f32.mxu0 0.0
      %1413 = vmatmul.mubr.f32.gmra.mxu0 %v954
      %v1414 = vpop.f32.mrf.mxu0
      %v1415 = vadd.f32 %v1190, %v1414
      %v1416 = vpop.f32.mrf.mxu0
      %1417 = vmatprep.mubr.f32.mxu0 0.0
      %1418 = vmatmul.mubr.f32.gmra.mxu0 %v957
      %v1419 = vpop.f32.mrf.mxu0
      %v1420 = vadd.f32 %v1195, %v1419
      %v1421 = vpop.f32.mrf.mxu0
      %1422 = vmatprep.mubr.f32.mxu0 0.0
      %1423 = vmatmul.mubr.f32.gmra.mxu0 %v960
      %v1424 = vpop.f32.mrf.mxu0
      %v1425 = vadd.f32 %v1200, %v1424
      %v1426 = vpop.f32.mrf.mxu0
      %1427 = vmatprep.mubr.f32.mxu0 0.0
      %1428 = vmatmul.mubr.f32.gmra.mxu0 %v963
      %v1429 = vpop.f32.mrf.mxu0
      %v1430 = vadd.f32 %v1205, %v1429
      %v1431 = vpop.f32.mrf.mxu0
      %1432 = vmatprep.mubr.f32.mxu0 0.0
      %1433 = vmatmul.mubr.f32.gmra.mxu0 %v966
      %v1434 = vpop.f32.mrf.mxu0
      %v1435 = vadd.f32 %v1210, %v1434
      %v1436 = vpop.f32.mrf.mxu0
      %1437 = vmatprep.mubr.f32.mxu0 0.0
      %1438 = vmatmul.mubr.f32.gmra.mxu0 %v969
      %v1439 = vpop.f32.mrf.mxu0
      %v1440 = vadd.f32 %v1215, %v1439
      %v1441 = vpop.f32.mrf.mxu0
      %1442 = vmatprep.mubr.f32.mxu0 0.0
      %1443 = vmatmul.mubr.f32.gmra.mxu0 %v972
      %v1444 = vpop.f32.mrf.mxu0
      %v1445 = vadd.f32 %v1220, %v1444
      %v1446 = vpop.f32.mrf.mxu0
      %1447 = vmatprep.mubr.f32.mxu0 0.0
      %1448 = vmatmul.mubr.f32.gmra.mxu0 %v975
      %v1449 = vpop.f32.mrf.mxu0
      %v1450 = vadd.f32 %v1225, %v1449
      %v1451 = vpop.f32.mrf.mxu0
      %1452 = vmatprep.mubr.f32.mxu0 0.0
      %1453 = vmatmul.mubr.f32.gmra.mxu0 %v978
      %v1454 = vpop.f32.mrf.mxu0
      %v1455 = vadd.f32 %v1230, %v1454
      %v1456 = vpop.f32.mrf.mxu0
      %1457 = vmatprep.mubr.f32.mxu0 0.0
      %1458 = vmatmul.mubr.f32.gmra.mxu0 %v981
      %v1459 = vpop.f32.mrf.mxu0
      %v1460 = vadd.f32 %v1235, %v1459
      %v1461 = vpop.f32.mrf.mxu0
      %1462 = vmatprep.mubr.f32.mxu0 0.0
      %1463 = vmatmul.mubr.f32.gmra.mxu0 %v984
      %v1464 = vpop.f32.mrf.mxu0
      %v1465 = vadd.f32 %v1240, %v1464
      %v1466 = vpop.f32.mrf.mxu0
      %1467 = vmatprep.mubr.f32.mxu0 0.0
      %1468 = vmatmul.mubr.f32.gmra.mxu0 %v987
      %v1469 = vpop.f32.mrf.mxu0
      %v1470 = vadd.f32 %v1245, %v1469
      %v1471 = vpop.f32.mrf.mxu0
      %1472 = vmatprep.mubr.f32.mxu0 0.0
      %1473 = vmatmul.mubr.f32.gmra.mxu0 %v990
      %v1474 = vpop.f32.mrf.mxu0
      %v1475 = vadd.f32 %v1250, %v1474
      %v1476 = vpop.f32.mrf.mxu0
      %1477 = vmatprep.mubr.f32.mxu0 0.0
      %1478 = vmatmul.mubr.f32.gmra.mxu0 %v993
      %v1479 = vpop.f32.mrf.mxu0
      %v1480 = vadd.f32 %v1255, %v1479
      %v1481 = vpop.f32.mrf.mxu0
      %1482 = vmatprep.mubr.f32.mxu0 0.0
      %1483 = vmatmul.mubr.f32.gmra.mxu0 %v996
      %v1484 = vpop.f32.mrf.mxu0
      %v1485 = vadd.f32 %v1260, %v1484
      %v1486 = vpop.f32.mrf.mxu0
      %1487 = vmatprep.mubr.f32.mxu0 0.0
      %1488 = vmatmul.mubr.f32.gmra.mxu0 %v999
      %v1489 = vpop.f32.mrf.mxu0
      %v1490 = vadd.f32 %v1265, %v1489
      %v1491 = vpop.f32.mrf.mxu0
      %1492 = vmatprep.mubr.f32.mxu0 0.0
      %1493 = vmatmul.mubr.f32.gmra.mxu0 %v1002
      %v1494 = vpop.f32.mrf.mxu0
      %v1495 = vadd.f32 %v1270, %v1494
      %v1496 = vpop.f32.mrf.mxu0
      %1497 = vmatprep.mubr.f32.mxu0 0.0
      %1498 = vmatmul.mubr.f32.gmra.mxu0 %v1005
      %v1499 = vpop.f32.mrf.mxu0
      %v1500 = vadd.f32 %v1275, %v1499
      %v1501 = vpop.f32.mrf.mxu0
      %1502 = vmatprep.mubr.f32.mxu0 0.0
      %1503 = vmatmul.mubr.f32.gmra.mxu0 %v1008
      %v1504 = vpop.f32.mrf.mxu0
      %v1505 = vadd.f32 %v1280, %v1504
      %v1506 = vpop.f32.mrf.mxu0
      %1507 = vmatprep.mubr.f32.mxu0 0.0
      %1508 = vmatmul.mubr.f32.gmra.mxu0 %v1011
      %v1509 = vpop.f32.mrf.mxu0
      %v1510 = vadd.f32 %v1285, %v1509
      %v1511 = vpop.f32.mrf.mxu0
      %1512 = vmatprep.mubr.f32.mxu0 0.0
      %1513 = vmatmul.mubr.f32.gmra.mxu0 %v1014
      %v1514 = vpop.f32.mrf.mxu0
      %v1515 = vadd.f32 %v1290, %v1514
      %v1516 = vpop.f32.mrf.mxu0
      %1517 = vmatprep.mubr.f32.mxu0 0.0
      %1518 = vmatmul.mubr.f32.gmra.mxu0 %v1017
      %v1519 = vpop.f32.mrf.mxu0
      %v1520 = vadd.f32 %v1295, %v1519
      %v1521 = vpop.f32.mrf.mxu0
      %1522 = vdwg.mxu0
      %vm1523 = vcmask 523264
      %v1524 = vsel %vm1523, %v1365, -inf
      %1525 = vmax.xlane.f32.xlu0 %v1524
      %v1526 = vpop.xlane.xlu0 %1525
      %v1527 = vsel %vm1523, %v1370, -inf
      %1528 = vmax.xlane.f32.xlu0 %v1527
      %v1529 = vpop.xlane.xlu0 %1528
      %v1530 = vsel %vm1523, %v1375, -inf
      %1531 = vmax.xlane.f32.xlu0 %v1530
      %v1532 = vpop.xlane.xlu0 %1531
      %v1533 = vsel %vm1523, %v1380, -inf
      %1534 = vmax.xlane.f32.xlu0 %v1533
      %v1535 = vpop.xlane.xlu0 %1534
      %v1536 = vsel %vm1523, %v1385, -inf
      %1537 = vmax.xlane.f32.xlu0 %v1536
      %v1538 = vpop.xlane.xlu0 %1537
      %v1539 = vsel %vm1523, %v1390, -inf
      %1540 = vmax.xlane.f32.xlu0 %v1539
      %v1541 = vpop.xlane.xlu0 %1540
      %v1542 = vsel %vm1523, %v1395, -inf
      %1543 = vmax.xlane.f32.xlu0 %v1542
      %v1544 = vpop.xlane.xlu0 %1543
      %v1545 = vsel %vm1523, %v1400, -inf
      %1546 = vmax.xlane.f32.xlu0 %v1545
      %v1547 = vpop.xlane.xlu0 %1546
      %v1548 = vsel %vm1523, %v1405, -inf
      %1549 = vmax.xlane.f32.xlu0 %v1548
      %v1550 = vpop.xlane.xlu0 %1549
      %v1551 = vsel %vm1523, %v1410, -inf
      %1552 = vmax.xlane.f32.xlu0 %v1551
      %v1553 = vpop.xlane.xlu0 %1552
      %v1554 = vsel %vm1523, %v1415, -inf
      %1555 = vmax.xlane.f32.xlu0 %v1554
      %v1556 = vpop.xlane.xlu0 %1555
      %v1557 = vsel %vm1523, %v1420, -inf
      %1558 = vmax.xlane.f32.xlu0 %v1557
      %v1559 = vpop.xlane.xlu0 %1558
      %v1560 = vsel %vm1523, %v1425, -inf
      %1561 = vmax.xlane.f32.xlu0 %v1560
      %v1562 = vpop.xlane.xlu0 %1561
      %v1563 = vsel %vm1523, %v1430, -inf
      %1564 = vmax.xlane.f32.xlu0 %v1563
      %v1565 = vpop.xlane.xlu0 %1564
      %v1566 = vsel %vm1523, %v1435, -inf
      %1567 = vmax.xlane.f32.xlu0 %v1566
      %v1568 = vpop.xlane.xlu0 %1567
      %v1569 = vsel %vm1523, %v1440, -inf
      %1570 = vmax.xlane.f32.xlu0 %v1569
      %v1571 = vpop.xlane.xlu0 %1570
      %v1572 = vsel %vm1523, %v1445, -inf
      %1573 = vmax.xlane.f32.xlu0 %v1572
      %v1574 = vpop.xlane.xlu0 %1573
      %v1575 = vsel %vm1523, %v1450, -inf
      %1576 = vmax.xlane.f32.xlu0 %v1575
      %v1577 = vpop.xlane.xlu0 %1576
      %v1578 = vsel %vm1523, %v1455, -inf
      %1579 = vmax.xlane.f32.xlu0 %v1578
      %v1580 = vpop.xlane.xlu0 %1579
      %v1581 = vsel %vm1523, %v1460, -inf
      %1582 = vmax.xlane.f32.xlu0 %v1581
      %v1583 = vpop.xlane.xlu0 %1582
      %v1584 = vsel %vm1523, %v1465, -inf
      %1585 = vmax.xlane.f32.xlu0 %v1584
      %v1586 = vpop.xlane.xlu0 %1585
      %v1587 = vsel %vm1523, %v1470, -inf
      %1588 = vmax.xlane.f32.xlu0 %v1587
      %v1589 = vpop.xlane.xlu0 %1588
      %v1590 = vsel %vm1523, %v1475, -inf
      %1591 = vmax.xlane.f32.xlu0 %v1590
      %v1592 = vpop.xlane.xlu0 %1591
      %v1593 = vsel %vm1523, %v1480, -inf
      %1594 = vmax.xlane.f32.xlu0 %v1593
      %v1595 = vpop.xlane.xlu0 %1594
      %v1596 = vsel %vm1523, %v1485, -inf
      %1597 = vmax.xlane.f32.xlu0 %v1596
      %v1598 = vpop.xlane.xlu0 %1597
      %v1599 = vsel %vm1523, %v1490, -inf
      %1600 = vmax.xlane.f32.xlu0 %v1599
      %v1601 = vpop.xlane.xlu0 %1600
      %v1602 = vsel %vm1523, %v1495, -inf
      %1603 = vmax.xlane.f32.xlu0 %v1602
      %v1604 = vpop.xlane.xlu0 %1603
      %v1605 = vsel %vm1523, %v1500, -inf
      %1606 = vmax.xlane.f32.xlu0 %v1605
      %v1607 = vpop.xlane.xlu0 %1606
      %v1608 = vsel %vm1523, %v1505, -inf
      %1609 = vmax.xlane.f32.xlu0 %v1608
      %v1610 = vpop.xlane.xlu0 %1609
      %v1611 = vsel %vm1523, %v1510, -inf
      %1612 = vmax.xlane.f32.xlu0 %v1611
      %v1613 = vpop.xlane.xlu0 %1612
      %v1614 = vsel %vm1523, %v1515, -inf
      %1615 = vmax.xlane.f32.xlu0 %v1614
      %v1616 = vpop.xlane.xlu0 %1615
      %v1617 = vsel %vm1523, %v1520, -inf
      %1618 = vmax.xlane.f32.xlu0 %v1617
      %v1619 = vpop.xlane.xlu0 %1618
      %v1620 = vsub.f32 %v1365, %v1526
      %v1621 = vsub.f32 %v1370, %v1529
      %v1622 = vsub.f32 %v1375, %v1532
      %v1623 = vsub.f32 %v1380, %v1535
      %v1624 = vsub.f32 %v1385, %v1538
      %v1625 = vsub.f32 %v1390, %v1541
      %v1626 = vsub.f32 %v1395, %v1544
      %v1627 = vsub.f32 %v1400, %v1547
      %v1628 = vsub.f32 %v1405, %v1550
      %v1629 = vsub.f32 %v1410, %v1553
      %v1630 = vsub.f32 %v1415, %v1556
      %v1631 = vsub.f32 %v1420, %v1559
      %v1632 = vsub.f32 %v1425, %v1562
      %v1633 = vsub.f32 %v1430, %v1565
      %v1634 = vsub.f32 %v1435, %v1568
      %v1635 = vsub.f32 %v1440, %v1571
      %v1636 = vsub.f32 %v1445, %v1574
      %v1637 = vsub.f32 %v1450, %v1577
      %v1638 = vsub.f32 %v1455, %v1580
      %v1639 = vsub.f32 %v1460, %v1583
      %v1640 = vsub.f32 %v1465, %v1586
      %v1641 = vsub.f32 %v1470, %v1589
      %v1642 = vsub.f32 %v1475, %v1592
      %v1643 = vsub.f32 %v1480, %v1595
      %v1644 = vsub.f32 %v1485, %v1598
      %v1645 = vsub.f32 %v1490, %v1601
      %v1646 = vsub.f32 %v1495, %v1604
      %v1647 = vsub.f32 %v1500, %v1607
      %v1648 = vsub.f32 %v1505, %v1610
      %v1649 = vsub.f32 %v1510, %v1613
      %v1650 = vsub.f32 %v1515, %v1616
      %v1651 = vsub.f32 %v1520, %v1619
      %v1652 = vmul.f32 %v1620, 1.442695
      %v1653 = vpow.pop %v1652
      %v1654 = vmul.f32 %v1621, 1.442695
      %v1655 = vpow.pop %v1654
      %v1656 = vmul.f32 %v1622, 1.442695
      %v1657 = vpow.pop %v1656
      %v1658 = vmul.f32 %v1623, 1.442695
      %v1659 = vpow.pop %v1658
      %v1660 = vmul.f32 %v1624, 1.442695
      %v1661 = vpow.pop %v1660
      %v1662 = vmul.f32 %v1625, 1.442695
      %v1663 = vpow.pop %v1662
      %v1664 = vmul.f32 %v1626, 1.442695
      %v1665 = vpow.pop %v1664
      %v1666 = vmul.f32 %v1627, 1.442695
      %v1667 = vpow.pop %v1666
      %v1668 = vmul.f32 %v1628, 1.442695
      %v1669 = vpow.pop %v1668
      %v1670 = vmul.f32 %v1629, 1.442695
      %v1671 = vpow.pop %v1670
      %v1672 = vmul.f32 %v1630, 1.442695
      %v1673 = vpow.pop %v1672
      %v1674 = vmul.f32 %v1631, 1.442695
      %v1675 = vpow.pop %v1674
      %v1676 = vmul.f32 %v1632, 1.442695
      %v1677 = vpow.pop %v1676
      %v1678 = vmul.f32 %v1633, 1.442695
      %v1679 = vpow.pop %v1678
      %v1680 = vmul.f32 %v1634, 1.442695
      %v1681 = vpow.pop %v1680
      %v1682 = vmul.f32 %v1635, 1.442695
      %v1683 = vpow.pop %v1682
      %v1684 = vmul.f32 %v1636, 1.442695
      %v1685 = vpow.pop %v1684
      %v1686 = vmul.f32 %v1637, 1.442695
      %v1687 = vpow.pop %v1686
      %v1688 = vmul.f32 %v1638, 1.442695
      %v1689 = vpow.pop %v1688
      %v1690 = vmul.f32 %v1639, 1.442695
      %v1691 = vpow.pop %v1690
      %v1692 = vmul.f32 %v1640, 1.442695
      %v1693 = vpow.pop %v1692
      %v1694 = vmul.f32 %v1641, 1.442695
      %v1695 = vpow.pop %v1694
      %v1696 = vmul.f32 %v1642, 1.442695
      %v1697 = vpow.pop %v1696
      %v1698 = vmul.f32 %v1643, 1.442695
      %v1699 = vpow.pop %v1698
      %v1700 = vmul.f32 %v1644, 1.442695
      %v1701 = vpow.pop %v1700
      %v1702 = vmul.f32 %v1645, 1.442695
      %v1703 = vpow.pop %v1702
      %v1704 = vmul.f32 %v1646, 1.442695
      %v1705 = vpow.pop %v1704
      %v1706 = vmul.f32 %v1647, 1.442695
      %v1707 = vpow.pop %v1706
      %v1708 = vmul.f32 %v1648, 1.442695
      %v1709 = vpow.pop %v1708
      %v1710 = vmul.f32 %v1649, 1.442695
      %v1711 = vpow.pop %v1710
      %v1712 = vmul.f32 %v1650, 1.442695
      %v1713 = vpow.pop %v1712
      %v1714 = vmul.f32 %v1651, 1.442695
      %v1715 = vpow.pop %v1714
      %v1716 = vld [vmem:[%s5] sm:$0xff]
      %v1717 = vld [vmem:[%s5 + $0x8] sm:$0xff]
      %v1718 = vld [vmem:[%s5 + $0x10] sm:$0xff]
      %v1719 = vld [vmem:[%s5 + $0x18] sm:$0xff]
      %v1720 = vld [vmem:[%s5 + $0x20] sm:$0xff]
      %v1721 = vld [vmem:[%s5 + $0x28] sm:$0xff]
      %v1722 = vld [vmem:[%s5 + $0x30] sm:$0xff]
      %v1723 = vld [vmem:[%s5 + $0x38] sm:$0xff]
      %v1725 = vsel %vm1523, %v1653, 0
      %v1728 = vsel %vm1523, %v1655, 0
      %v1731 = vsel %vm1523, %v1657, 0
      %v1734 = vsel %vm1523, %v1659, 0
      %v1737 = vsel %vm1523, %v1661, 0
      %v1740 = vsel %vm1523, %v1663, 0
      %v1743 = vsel %vm1523, %v1665, 0
      %v1746 = vsel %vm1523, %v1667, 0
      %v1749 = vsel %vm1523, %v1669, 0
      %v1752 = vsel %vm1523, %v1671, 0
      %v1755 = vsel %vm1523, %v1673, 0
      %v1758 = vsel %vm1523, %v1675, 0
      %v1761 = vsel %vm1523, %v1677, 0
      %v1764 = vsel %vm1523, %v1679, 0
      %v1767 = vsel %vm1523, %v1681, 0
      %v1770 = vsel %vm1523, %v1683, 0
      %v1773 = vsel %vm1523, %v1685, 0
      %v1776 = vsel %vm1523, %v1687, 0
      %v1779 = vsel %vm1523, %v1689, 0
      %v1782 = vsel %vm1523, %v1691, 0
      %v1785 = vsel %vm1523, %v1693, 0
      %v1788 = vsel %vm1523, %v1695, 0
      %v1791 = vsel %vm1523, %v1697, 0
      %v1794 = vsel %vm1523, %v1699, 0
      %v1797 = vsel %vm1523, %v1701, 0
      %v1800 = vsel %vm1523, %v1703, 0
      %v1803 = vsel %vm1523, %v1705, 0
      %v1806 = vsel %vm1523, %v1707, 0
      %v1809 = vsel %vm1523, %v1709, 0
      %v1812 = vsel %vm1523, %v1711, 0
      %v1815 = vsel %vm1523, %v1713, 0
      %v1818 = vsel %vm1523, %v1715, 0
      %1820 = vmatprep.subr.mxu0 0.0
      %1821 = vmatpush1.msra.mxu0 0.0
      %1822 = vmatprep.subr.mxu0 0.0
      %1823 = vmatpush1.msra.mxu0 0.0
      %1824 = vmatprep.subr.mxu0 0.0
      %1825 = vmatpush1.msra.mxu0 0.0
      %1826 = vmatprep.subr.mxu0 0.0
      %1827 = vmatpush1.msra.mxu0 0.0
      %1828 = vmatprep.subr.mxu0 0.0
      %1829 = vmatpush1.msra.mxu0 0.0
      %1830 = vmatprep.subr.mxu0 0.0
      %1831 = vmatpush1.msra.mxu0 0.0
      %1832 = vmatprep.subr.mxu0 0.0
      %1833 = vmatpush1.msra.mxu0 0.0
      %1834 = vmatprep.subr.mxu0 0.0
      %1835 = vmatpush1.msra.mxu0 0.0
      %1836 = vmatprep.subr.mxu0 0.0
      %1837 = vmatpush1.msra.mxu0 %v1723
      %1838 = vmatprep.subr.mxu0 0.0
      %1839 = vmatpush1.msra.mxu0 %v1722
      %1840 = vmatprep.subr.mxu0 0.0
      %1841 = vmatpush1.msra.mxu0 %v1721
      %1842 = vmatprep.subr.mxu0 0.0
      %1843 = vmatpush1.msra.mxu0 %v1720
      %1844 = vmatprep.subr.mxu0 0.0
      %1845 = vmatpush1.msra.mxu0 %v1719
      %1846 = vmatprep.subr.mxu0 0.0
      %1847 = vmatpush1.msra.mxu0 %v1718
      %1848 = vmatprep.subr.mxu0 0.0
      %1849 = vmatpush1.msra.mxu0 %v1717
      %1850 = vmatprep.subr.mxu0 0.0
      %1851 = vmatpush1.msra.mxu0 %v1716
      %1852 = vmatprep.subr.mxu0 0.0
      %1853 = vmatpush2.msra.mxu0 0.0
      %1854 = vmatprep.subr.mxu0 0.0
      %1855 = vmatpush2.msra.mxu0 0.0
      %1856 = vmatprep.subr.mxu0 0.0
      %1857 = vmatpush2.msra.mxu0 0.0
      %1858 = vmatprep.subr.mxu0 0.0
      %1859 = vmatpush2.msra.mxu0 0.0
      %1860 = vmatprep.subr.mxu0 0.0
      %1861 = vmatpush2.msra.mxu0 0.0
      %1862 = vmatprep.subr.mxu0 0.0
      %1863 = vmatpush2.msra.mxu0 0.0
      %1864 = vmatprep.subr.mxu0 0.0
      %1865 = vmatpush2.msra.mxu0 0.0
      %1866 = vmatprep.subr.mxu0 0.0
      %1867 = vmatpush2.msra.mxu0 0.0
      %1868 = vmatprep.subr.mxu0 0.0
      %1869 = vmatpush2.msra.mxu0 0.0
      %1870 = vmatprep.subr.mxu0 0.0
      %1871 = vmatpush2.msra.mxu0 0.0
      %1872 = vmatprep.subr.mxu0 0.0
      %1873 = vmatpush2.msra.mxu0 0.0
      %1874 = vmatprep.subr.mxu0 0.0
      %1875 = vmatpush2.msra.mxu0 0.0
      %1876 = vmatprep.subr.mxu0 0.0
      %1877 = vmatpush2.msra.mxu0 0.0
      %1878 = vmatprep.subr.mxu0 0.0
      %1879 = vmatpush2.msra.mxu0 0.0
      %1880 = vmatprep.subr.mxu0 0.0
      %1881 = vmatpush2.msra.mxu0 0.0
      %1882 = vmatprep.subr.mxu0 0.0
      %1883 = vmatpush2.msra.mxu0 0.0
      %1884 = vmatprep.mubr.f32.mxu0 0.0
      %1885 = vmatmul.mubr.f32.gmra.mxu0 %v1725
      %v1886 = vpop.f32.mrf.mxu0
      %v1887 = vadd.f32 0.0, %v1886
      %v1888 = vpop.f32.mrf.mxu0
      %1889 = vmatprep.mubr.f32.mxu0 0.0
      %1890 = vmatmul.mubr.f32.gmra.mxu0 %v1728
      %v1891 = vpop.f32.mrf.mxu0
      %v1892 = vadd.f32 0.0, %v1891
      %v1893 = vpop.f32.mrf.mxu0
      %1894 = vmatprep.mubr.f32.mxu0 0.0
      %1895 = vmatmul.mubr.f32.gmra.mxu0 %v1731
      %v1896 = vpop.f32.mrf.mxu0
      %v1897 = vadd.f32 0.0, %v1896
      %v1898 = vpop.f32.mrf.mxu0
      %1899 = vmatprep.mubr.f32.mxu0 0.0
      %1900 = vmatmul.mubr.f32.gmra.mxu0 %v1734
      %v1901 = vpop.f32.mrf.mxu0
      %v1902 = vadd.f32 0.0, %v1901
      %v1903 = vpop.f32.mrf.mxu0
      %1904 = vmatprep.mubr.f32.mxu0 0.0
      %1905 = vmatmul.mubr.f32.gmra.mxu0 %v1737
      %v1906 = vpop.f32.mrf.mxu0
      %v1907 = vadd.f32 0.0, %v1906
      %v1908 = vpop.f32.mrf.mxu0
      %1909 = vmatprep.mubr.f32.mxu0 0.0
      %1910 = vmatmul.mubr.f32.gmra.mxu0 %v1740
      %v1911 = vpop.f32.mrf.mxu0
      %v1912 = vadd.f32 0.0, %v1911
      %v1913 = vpop.f32.mrf.mxu0
      %1914 = vmatprep.mubr.f32.mxu0 0.0
      %1915 = vmatmul.mubr.f32.gmra.mxu0 %v1743
      %v1916 = vpop.f32.mrf.mxu0
      %v1917 = vadd.f32 0.0, %v1916
      %v1918 = vpop.f32.mrf.mxu0
      %1919 = vmatprep.mubr.f32.mxu0 0.0
      %1920 = vmatmul.mubr.f32.gmra.mxu0 %v1746
      %v1921 = vpop.f32.mrf.mxu0
      %v1922 = vadd.f32 0.0, %v1921
      %v1923 = vpop.f32.mrf.mxu0
      %1924 = vmatprep.mubr.f32.mxu0 0.0
      %1925 = vmatmul.mubr.f32.gmra.mxu0 %v1749
      %v1926 = vpop.f32.mrf.mxu0
      %v1927 = vadd.f32 0.0, %v1926
      %v1928 = vpop.f32.mrf.mxu0
      %1929 = vmatprep.mubr.f32.mxu0 0.0
      %1930 = vmatmul.mubr.f32.gmra.mxu0 %v1752
      %v1931 = vpop.f32.mrf.mxu0
      %v1932 = vadd.f32 0.0, %v1931
      %v1933 = vpop.f32.mrf.mxu0
      %1934 = vmatprep.mubr.f32.mxu0 0.0
      %1935 = vmatmul.mubr.f32.gmra.mxu0 %v1755
      %v1936 = vpop.f32.mrf.mxu0
      %v1937 = vadd.f32 0.0, %v1936
      %v1938 = vpop.f32.mrf.mxu0
      %1939 = vmatprep.mubr.f32.mxu0 0.0
      %1940 = vmatmul.mubr.f32.gmra.mxu0 %v1758
      %v1941 = vpop.f32.mrf.mxu0
      %v1942 = vadd.f32 0.0, %v1941
      %v1943 = vpop.f32.mrf.mxu0
      %1944 = vmatprep.mubr.f32.mxu0 0.0
      %1945 = vmatmul.mubr.f32.gmra.mxu0 %v1761
      %v1946 = vpop.f32.mrf.mxu0
      %v1947 = vadd.f32 0.0, %v1946
      %v1948 = vpop.f32.mrf.mxu0
      %1949 = vmatprep.mubr.f32.mxu0 0.0
      %1950 = vmatmul.mubr.f32.gmra.mxu0 %v1764
      %v1951 = vpop.f32.mrf.mxu0
      %v1952 = vadd.f32 0.0, %v1951
      %v1953 = vpop.f32.mrf.mxu0
      %1954 = vmatprep.mubr.f32.mxu0 0.0
      %1955 = vmatmul.mubr.f32.gmra.mxu0 %v1767
      %v1956 = vpop.f32.mrf.mxu0
      %v1957 = vadd.f32 0.0, %v1956
      %v1958 = vpop.f32.mrf.mxu0
      %1959 = vmatprep.mubr.f32.mxu0 0.0
      %1960 = vmatmul.mubr.f32.gmra.mxu0 %v1770
      %v1961 = vpop.f32.mrf.mxu0
      %v1962 = vadd.f32 0.0, %v1961
      %v1963 = vpop.f32.mrf.mxu0
      %1964 = vmatprep.mubr.f32.mxu0 0.0
      %1965 = vmatmul.mubr.f32.gmra.mxu0 %v1773
      %v1966 = vpop.f32.mrf.mxu0
      %v1967 = vadd.f32 0.0, %v1966
      %v1968 = vpop.f32.mrf.mxu0
      %1969 = vmatprep.mubr.f32.mxu0 0.0
      %1970 = vmatmul.mubr.f32.gmra.mxu0 %v1776
      %v1971 = vpop.f32.mrf.mxu0
      %v1972 = vadd.f32 0.0, %v1971
      %v1973 = vpop.f32.mrf.mxu0
      %1974 = vmatprep.mubr.f32.mxu0 0.0
      %1975 = vmatmul.mubr.f32.gmra.mxu0 %v1779
      %v1976 = vpop.f32.mrf.mxu0
      %v1977 = vadd.f32 0.0, %v1976
      %v1978 = vpop.f32.mrf.mxu0
      %1979 = vmatprep.mubr.f32.mxu0 0.0
      %1980 = vmatmul.mubr.f32.gmra.mxu0 %v1782
      %v1981 = vpop.f32.mrf.mxu0
      %v1982 = vadd.f32 0.0, %v1981
      %v1983 = vpop.f32.mrf.mxu0
      %1984 = vmatprep.mubr.f32.mxu0 0.0
      %1985 = vmatmul.mubr.f32.gmra.mxu0 %v1785
      %v1986 = vpop.f32.mrf.mxu0
      %v1987 = vadd.f32 0.0, %v1986
      %v1988 = vpop.f32.mrf.mxu0
      %1989 = vmatprep.mubr.f32.mxu0 0.0
      %1990 = vmatmul.mubr.f32.gmra.mxu0 %v1788
      %v1991 = vpop.f32.mrf.mxu0
      %v1992 = vadd.f32 0.0, %v1991
      %v1993 = vpop.f32.mrf.mxu0
      %1994 = vmatprep.mubr.f32.mxu0 0.0
      %1995 = vmatmul.mubr.f32.gmra.mxu0 %v1791
      %v1996 = vpop.f32.mrf.mxu0
      %v1997 = vadd.f32 0.0, %v1996
      %v1998 = vpop.f32.mrf.mxu0
      %1999 = vmatprep.mubr.f32.mxu0 0.0
      %2000 = vmatmul.mubr.f32.gmra.mxu0 %v1794
      %v2001 = vpop.f32.mrf.mxu0
      %v2002 = vadd.f32 0.0, %v2001
      %v2003 = vpop.f32.mrf.mxu0
      %2004 = vmatprep.mubr.f32.mxu0 0.0
      %2005 = vmatmul.mubr.f32.gmra.mxu0 %v1797
      %v2006 = vpop.f32.mrf.mxu0
      %v2007 = vadd.f32 0.0, %v2006
      %v2008 = vpop.f32.mrf.mxu0
      %2009 = vmatprep.mubr.f32.mxu0 0.0
      %2010 = vmatmul.mubr.f32.gmra.mxu0 %v1800
      %v2011 = vpop.f32.mrf.mxu0
      %v2012 = vadd.f32 0.0, %v2011
      %v2013 = vpop.f32.mrf.mxu0
      %2014 = vmatprep.mubr.f32.mxu0 0.0
      %2015 = vmatmul.mubr.f32.gmra.mxu0 %v1803
      %v2016 = vpop.f32.mrf.mxu0
      %v2017 = vadd.f32 0.0, %v2016
      %v2018 = vpop.f32.mrf.mxu0
      %2019 = vmatprep.mubr.f32.mxu0 0.0
      %2020 = vmatmul.mubr.f32.gmra.mxu0 %v1806
      %v2021 = vpop.f32.mrf.mxu0
      %v2022 = vadd.f32 0.0, %v2021
      %v2023 = vpop.f32.mrf.mxu0
      %2024 = vmatprep.mubr.f32.mxu0 0.0
      %2025 = vmatmul.mubr.f32.gmra.mxu0 %v1809
      %v2026 = vpop.f32.mrf.mxu0
      %v2027 = vadd.f32 0.0, %v2026
      %v2028 = vpop.f32.mrf.mxu0
      %2029 = vmatprep.mubr.f32.mxu0 0.0
      %2030 = vmatmul.mubr.f32.gmra.mxu0 %v1812
      %v2031 = vpop.f32.mrf.mxu0
      %v2032 = vadd.f32 0.0, %v2031
      %v2033 = vpop.f32.mrf.mxu0
      %2034 = vmatprep.mubr.f32.mxu0 0.0
      %2035 = vmatmul.mubr.f32.gmra.mxu0 %v1815
      %v2036 = vpop.f32.mrf.mxu0
      %v2037 = vadd.f32 0.0, %v2036
      %v2038 = vpop.f32.mrf.mxu0
      %2039 = vmatprep.mubr.f32.mxu0 0.0
      %2040 = vmatmul.mubr.f32.gmra.mxu0 %v1818
      %v2041 = vpop.f32.mrf.mxu0
      %v2042 = vadd.f32 0.0, %v2041
      %v2043 = vpop.f32.mrf.mxu0
      %2044 = vdwg.mxu0
      %v2045 = vmax.f32 %v1887, 1e-30
      %v2046 = vmax.f32 %v1892, 1e-30
      %v2047 = vmax.f32 %v1897, 1e-30
      %v2048 = vmax.f32 %v1902, 1e-30
      %v2049 = vmax.f32 %v1907, 1e-30
      %v2050 = vmax.f32 %v1912, 1e-30
      %v2051 = vmax.f32 %v1917, 1e-30
      %v2052 = vmax.f32 %v1922, 1e-30
      %v2053 = vmax.f32 %v1927, 1e-30
      %v2054 = vmax.f32 %v1932, 1e-30
      %v2055 = vmax.f32 %v1937, 1e-30
      %v2056 = vmax.f32 %v1942, 1e-30
      %v2057 = vmax.f32 %v1947, 1e-30
      %v2058 = vmax.f32 %v1952, 1e-30
      %v2059 = vmax.f32 %v1957, 1e-30
      %v2060 = vmax.f32 %v1962, 1e-30
      %v2061 = vmax.f32 %v1967, 1e-30
      %v2062 = vmax.f32 %v1972, 1e-30
      %v2063 = vmax.f32 %v1977, 1e-30
      %v2064 = vmax.f32 %v1982, 1e-30
      %v2065 = vmax.f32 %v1987, 1e-30
      %v2066 = vmax.f32 %v1992, 1e-30
      %v2067 = vmax.f32 %v1997, 1e-30
      %v2068 = vmax.f32 %v2002, 1e-30
      %v2069 = vmax.f32 %v2007, 1e-30
      %v2070 = vmax.f32 %v2012, 1e-30
      %v2071 = vmax.f32 %v2017, 1e-30
      %v2072 = vmax.f32 %v2022, 1e-30
      %v2073 = vmax.f32 %v2027, 1e-30
      %v2074 = vmax.f32 %v2032, 1e-30
      %v2075 = vmax.f32 %v2037, 1e-30
      %v2076 = vmax.f32 %v2042, 1e-30
      %v2077 = vrcp.pop %v2045
      %v2078 = vrcp.pop %v2046
      %v2079 = vrcp.pop %v2047
      %v2080 = vrcp.pop %v2048
      %v2081 = vrcp.pop %v2049
      %v2082 = vrcp.pop %v2050
      %v2083 = vrcp.pop %v2051
      %v2084 = vrcp.pop %v2052
      %v2085 = vrcp.pop %v2053
      %v2086 = vrcp.pop %v2054
      %v2087 = vrcp.pop %v2055
      %v2088 = vrcp.pop %v2056
      %v2089 = vrcp.pop %v2057
      %v2090 = vrcp.pop %v2058
      %v2091 = vrcp.pop %v2059
      %v2092 = vrcp.pop %v2060
      %v2093 = vrcp.pop %v2061
      %v2094 = vrcp.pop %v2062
      %v2095 = vrcp.pop %v2063
      %v2096 = vrcp.pop %v2064
      %v2097 = vrcp.pop %v2065
      %v2098 = vrcp.pop %v2066
      %v2099 = vrcp.pop %v2067
      %v2100 = vrcp.pop %v2068
      %v2101 = vrcp.pop %v2069
      %v2102 = vrcp.pop %v2070
      %v2103 = vrcp.pop %v2071
      %v2104 = vrcp.pop %v2072
      %v2105 = vrcp.pop %v2073
      %v2106 = vrcp.pop %v2074
      %v2107 = vrcp.pop %v2075
      %v2108 = vrcp.pop %v2076
      %v2109 = vmul.f32 %v1653, %v2077
      %v2110 = vmul.f32 %v1655, %v2078
      %v2111 = vmul.f32 %v1657, %v2079
      %v2112 = vmul.f32 %v1659, %v2080
      %v2113 = vmul.f32 %v1661, %v2081
      %v2114 = vmul.f32 %v1663, %v2082
      %v2115 = vmul.f32 %v1665, %v2083
      %v2116 = vmul.f32 %v1667, %v2084
      %v2117 = vmul.f32 %v1669, %v2085
      %v2118 = vmul.f32 %v1671, %v2086
      %v2119 = vmul.f32 %v1673, %v2087
      %v2120 = vmul.f32 %v1675, %v2088
      %v2121 = vmul.f32 %v1677, %v2089
      %v2122 = vmul.f32 %v1679, %v2090
      %v2123 = vmul.f32 %v1681, %v2091
      %v2124 = vmul.f32 %v1683, %v2092
      %v2125 = vmul.f32 %v1685, %v2093
      %v2126 = vmul.f32 %v1687, %v2094
      %v2127 = vmul.f32 %v1689, %v2095
      %v2128 = vmul.f32 %v1691, %v2096
      %v2129 = vmul.f32 %v1693, %v2097
      %v2130 = vmul.f32 %v1695, %v2098
      %v2131 = vmul.f32 %v1697, %v2099
      %v2132 = vmul.f32 %v1699, %v2100
      %v2133 = vmul.f32 %v1701, %v2101
      %v2134 = vmul.f32 %v1703, %v2102
      %v2135 = vmul.f32 %v1705, %v2103
      %v2136 = vmul.f32 %v1707, %v2104
      %v2137 = vmul.f32 %v1709, %v2105
      %v2138 = vmul.f32 %v1711, %v2106
      %v2139 = vmul.f32 %v1713, %v2107
      %v2140 = vmul.f32 %v1715, %v2108
      %2173 = vrot.lane.b32.xlu0 %v2109, 96
      %v2174 = vpop.permute.xlu0 %2173
      %2175 = vrot.lane.b32.xlu0 %v2110, 96
      %v2176 = vpop.permute.xlu0 %2175
      %2177 = vrot.lane.b32.xlu0 %v2111, 96
      %v2178 = vpop.permute.xlu0 %2177
      %2179 = vrot.lane.b32.xlu0 %v2112, 96
      %v2180 = vpop.permute.xlu0 %2179
      %2181 = vrot.lane.b32.xlu0 %v2113, 96
      %v2182 = vpop.permute.xlu0 %2181
      %2183 = vrot.lane.b32.xlu0 %v2114, 96
      %v2184 = vpop.permute.xlu0 %2183
      %2185 = vrot.lane.b32.xlu0 %v2115, 96
      %v2186 = vpop.permute.xlu0 %2185
      %2187 = vrot.lane.b32.xlu0 %v2116, 96
      %v2188 = vpop.permute.xlu0 %2187
      %2189 = vrot.lane.b32.xlu0 %v2117, 96
      %v2190 = vpop.permute.xlu0 %2189
      %2191 = vrot.lane.b32.xlu0 %v2118, 96
      %v2192 = vpop.permute.xlu0 %2191
      %2193 = vrot.lane.b32.xlu0 %v2119, 96
      %v2194 = vpop.permute.xlu0 %2193
      %2195 = vrot.lane.b32.xlu0 %v2120, 96
      %v2196 = vpop.permute.xlu0 %2195
      %2197 = vrot.lane.b32.xlu0 %v2121, 96
      %v2198 = vpop.permute.xlu0 %2197
      %2199 = vrot.lane.b32.xlu0 %v2122, 96
      %v2200 = vpop.permute.xlu0 %2199
      %2201 = vrot.lane.b32.xlu0 %v2123, 96
      %v2202 = vpop.permute.xlu0 %2201
      %2203 = vrot.lane.b32.xlu0 %v2124, 96
      %v2204 = vpop.permute.xlu0 %2203
      %2205 = vrot.lane.b32.xlu0 %v2125, 96
      %v2206 = vpop.permute.xlu0 %2205
      %2207 = vrot.lane.b32.xlu0 %v2126, 96
      %v2208 = vpop.permute.xlu0 %2207
      %2209 = vrot.lane.b32.xlu0 %v2127, 96
      %v2210 = vpop.permute.xlu0 %2209
      %2211 = vrot.lane.b32.xlu0 %v2128, 96
      %v2212 = vpop.permute.xlu0 %2211
      %2213 = vrot.lane.b32.xlu0 %v2129, 96
      %v2214 = vpop.permute.xlu0 %2213
      %2215 = vrot.lane.b32.xlu0 %v2130, 96
      %v2216 = vpop.permute.xlu0 %2215
      %2217 = vrot.lane.b32.xlu0 %v2131, 96
      %v2218 = vpop.permute.xlu0 %2217
      %2219 = vrot.lane.b32.xlu0 %v2132, 96
      %v2220 = vpop.permute.xlu0 %2219
      %2221 = vrot.lane.b32.xlu0 %v2133, 96
      %v2222 = vpop.permute.xlu0 %2221
      %2223 = vrot.lane.b32.xlu0 %v2134, 96
      %v2224 = vpop.permute.xlu0 %2223
      %2225 = vrot.lane.b32.xlu0 %v2135, 96
      %v2226 = vpop.permute.xlu0 %2225
      %2227 = vrot.lane.b32.xlu0 %v2136, 96
      %v2228 = vpop.permute.xlu0 %2227
      %2229 = vrot.lane.b32.xlu0 %v2137, 96
      %v2230 = vpop.permute.xlu0 %2229
      %2231 = vrot.lane.b32.xlu0 %v2138, 96
      %v2232 = vpop.permute.xlu0 %2231
      %2233 = vrot.lane.b32.xlu0 %v2139, 96
      %v2234 = vpop.permute.xlu0 %2233
      %2235 = vrot.lane.b32.xlu0 %v2140, 96
      %v2236 = vpop.permute.xlu0 %2235
      %v2269 = vmul.f32 %v2109, %v2174
      %v2270 = vmul.f32 %v2110, %v2176
      %v2271 = vmul.f32 %v2111, %v2178
      %v2272 = vmul.f32 %v2112, %v2180
      %v2273 = vmul.f32 %v2113, %v2182
      %v2274 = vmul.f32 %v2114, %v2184
      %v2275 = vmul.f32 %v2115, %v2186
      %v2276 = vmul.f32 %v2116, %v2188
      %v2277 = vmul.f32 %v2117, %v2190
      %v2278 = vmul.f32 %v2118, %v2192
      %v2279 = vmul.f32 %v2119, %v2194
      %v2280 = vmul.f32 %v2120, %v2196
      %v2281 = vmul.f32 %v2121, %v2198
      %v2282 = vmul.f32 %v2122, %v2200
      %v2283 = vmul.f32 %v2123, %v2202
      %v2284 = vmul.f32 %v2124, %v2204
      %v2285 = vmul.f32 %v2125, %v2206
      %v2286 = vmul.f32 %v2126, %v2208
      %v2287 = vmul.f32 %v2127, %v2210
      %v2288 = vmul.f32 %v2128, %v2212
      %v2289 = vmul.f32 %v2129, %v2214
      %v2290 = vmul.f32 %v2130, %v2216
      %v2291 = vmul.f32 %v2131, %v2218
      %v2292 = vmul.f32 %v2132, %v2220
      %v2293 = vmul.f32 %v2133, %v2222
      %v2294 = vmul.f32 %v2134, %v2224
      %v2295 = vmul.f32 %v2135, %v2226
      %v2296 = vmul.f32 %v2136, %v2228
      %v2297 = vmul.f32 %v2137, %v2230
      %v2298 = vmul.f32 %v2138, %v2232
      %v2299 = vmul.f32 %v2139, %v2234
      %v2300 = vmul.f32 %v2140, %v2236
      %v2301 = vld [vmem:[%s6] sm:$0xff]
      %v2302 = vld [vmem:[%s6 + $0x8] sm:$0xff]
      %v2303 = vld [vmem:[%s6 + $0x10] sm:$0xff]
      %v2304 = vld [vmem:[%s6 + $0x18] sm:$0xff]
      %v2306 = vsel %vm343, %v2269, 0
      %v2309 = vsel %vm343, %v2270, 0
      %v2312 = vsel %vm343, %v2271, 0
      %v2315 = vsel %vm343, %v2272, 0
      %v2318 = vsel %vm343, %v2273, 0
      %v2321 = vsel %vm343, %v2274, 0
      %v2324 = vsel %vm343, %v2275, 0
      %v2327 = vsel %vm343, %v2276, 0
      %v2330 = vsel %vm343, %v2277, 0
      %v2333 = vsel %vm343, %v2278, 0
      %v2336 = vsel %vm343, %v2279, 0
      %v2339 = vsel %vm343, %v2280, 0
      %v2342 = vsel %vm343, %v2281, 0
      %v2345 = vsel %vm343, %v2282, 0
      %v2348 = vsel %vm343, %v2283, 0
      %v2351 = vsel %vm343, %v2284, 0
      %v2354 = vsel %vm343, %v2285, 0
      %v2357 = vsel %vm343, %v2286, 0
      %v2360 = vsel %vm343, %v2287, 0
      %v2363 = vsel %vm343, %v2288, 0
      %v2366 = vsel %vm343, %v2289, 0
      %v2369 = vsel %vm343, %v2290, 0
      %v2372 = vsel %vm343, %v2291, 0
      %v2375 = vsel %vm343, %v2292, 0
      %v2378 = vsel %vm343, %v2293, 0
      %v2381 = vsel %vm343, %v2294, 0
      %v2384 = vsel %vm343, %v2295, 0
      %v2387 = vsel %vm343, %v2296, 0
      %v2390 = vsel %vm343, %v2297, 0
      %v2393 = vsel %vm343, %v2298, 0
      %v2396 = vsel %vm343, %v2299, 0
      %v2399 = vsel %vm343, %v2300, 0
      %2401 = vmatprep.subr.mxu0 0.0
      %2402 = vmatpush1.msra.mxu0 0.0
      %2403 = vmatprep.subr.mxu0 0.0
      %2404 = vmatpush1.msra.mxu0 0.0
      %2405 = vmatprep.subr.mxu0 0.0
      %2406 = vmatpush1.msra.mxu0 0.0
      %2407 = vmatprep.subr.mxu0 0.0
      %2408 = vmatpush1.msra.mxu0 0.0
      %2409 = vmatprep.subr.mxu0 0.0
      %2410 = vmatpush1.msra.mxu0 0.0
      %2411 = vmatprep.subr.mxu0 0.0
      %2412 = vmatpush1.msra.mxu0 0.0
      %2413 = vmatprep.subr.mxu0 0.0
      %2414 = vmatpush1.msra.mxu0 0.0
      %2415 = vmatprep.subr.mxu0 0.0
      %2416 = vmatpush1.msra.mxu0 0.0
      %2417 = vmatprep.subr.mxu0 0.0
      %2418 = vmatpush1.msra.mxu0 0.0
      %2419 = vmatprep.subr.mxu0 0.0
      %2420 = vmatpush1.msra.mxu0 0.0
      %2421 = vmatprep.subr.mxu0 0.0
      %2422 = vmatpush1.msra.mxu0 0.0
      %2423 = vmatprep.subr.mxu0 0.0
      %2424 = vmatpush1.msra.mxu0 0.0
      %2425 = vmatprep.subr.mxu0 0.0
      %2426 = vmatpush1.msra.mxu0 %v2304
      %2427 = vmatprep.subr.mxu0 0.0
      %2428 = vmatpush1.msra.mxu0 %v2303
      %2429 = vmatprep.subr.mxu0 0.0
      %2430 = vmatpush1.msra.mxu0 %v2302
      %2431 = vmatprep.subr.mxu0 0.0
      %2432 = vmatpush1.msra.mxu0 %v2301
      %2433 = vmatprep.subr.mxu0 0.0
      %2434 = vmatpush2.msra.mxu0 0.0
      %2435 = vmatprep.subr.mxu0 0.0
      %2436 = vmatpush2.msra.mxu0 0.0
      %2437 = vmatprep.subr.mxu0 0.0
      %2438 = vmatpush2.msra.mxu0 0.0
      %2439 = vmatprep.subr.mxu0 0.0
      %2440 = vmatpush2.msra.mxu0 0.0
      %2441 = vmatprep.subr.mxu0 0.0
      %2442 = vmatpush2.msra.mxu0 0.0
      %2443 = vmatprep.subr.mxu0 0.0
      %2444 = vmatpush2.msra.mxu0 0.0
      %2445 = vmatprep.subr.mxu0 0.0
      %2446 = vmatpush2.msra.mxu0 0.0
      %2447 = vmatprep.subr.mxu0 0.0
      %2448 = vmatpush2.msra.mxu0 0.0
      %2449 = vmatprep.subr.mxu0 0.0
      %2450 = vmatpush2.msra.mxu0 0.0
      %2451 = vmatprep.subr.mxu0 0.0
      %2452 = vmatpush2.msra.mxu0 0.0
      %2453 = vmatprep.subr.mxu0 0.0
      %2454 = vmatpush2.msra.mxu0 0.0
      %2455 = vmatprep.subr.mxu0 0.0
      %2456 = vmatpush2.msra.mxu0 0.0
      %2457 = vmatprep.subr.mxu0 0.0
      %2458 = vmatpush2.msra.mxu0 0.0
      %2459 = vmatprep.subr.mxu0 0.0
      %2460 = vmatpush2.msra.mxu0 0.0
      %2461 = vmatprep.subr.mxu0 0.0
      %2462 = vmatpush2.msra.mxu0 0.0
      %2463 = vmatprep.subr.mxu0 0.0
      %2464 = vmatpush2.msra.mxu0 0.0
      %2465 = vmatprep.mubr.f32.mxu0 0.0
      %2466 = vmatmul.mubr.f32.gmra.mxu0 %v2306
      %v2467 = vpop.f32.mrf.mxu0
      %v2468 = vadd.f32 0.0, %v2467
      %v2469 = vpop.f32.mrf.mxu0
      %2470 = vmatprep.mubr.f32.mxu0 0.0
      %2471 = vmatmul.mubr.f32.gmra.mxu0 %v2309
      %v2472 = vpop.f32.mrf.mxu0
      %v2473 = vadd.f32 0.0, %v2472
      %v2474 = vpop.f32.mrf.mxu0
      %2475 = vmatprep.mubr.f32.mxu0 0.0
      %2476 = vmatmul.mubr.f32.gmra.mxu0 %v2312
      %v2477 = vpop.f32.mrf.mxu0
      %v2478 = vadd.f32 0.0, %v2477
      %v2479 = vpop.f32.mrf.mxu0
      %2480 = vmatprep.mubr.f32.mxu0 0.0
      %2481 = vmatmul.mubr.f32.gmra.mxu0 %v2315
      %v2482 = vpop.f32.mrf.mxu0
      %v2483 = vadd.f32 0.0, %v2482
      %v2484 = vpop.f32.mrf.mxu0
      %2485 = vmatprep.mubr.f32.mxu0 0.0
      %2486 = vmatmul.mubr.f32.gmra.mxu0 %v2318
      %v2487 = vpop.f32.mrf.mxu0
      %v2488 = vadd.f32 0.0, %v2487
      %v2489 = vpop.f32.mrf.mxu0
      %2490 = vmatprep.mubr.f32.mxu0 0.0
      %2491 = vmatmul.mubr.f32.gmra.mxu0 %v2321
      %v2492 = vpop.f32.mrf.mxu0
      %v2493 = vadd.f32 0.0, %v2492
      %v2494 = vpop.f32.mrf.mxu0
      %2495 = vmatprep.mubr.f32.mxu0 0.0
      %2496 = vmatmul.mubr.f32.gmra.mxu0 %v2324
      %v2497 = vpop.f32.mrf.mxu0
      %v2498 = vadd.f32 0.0, %v2497
      %v2499 = vpop.f32.mrf.mxu0
      %2500 = vmatprep.mubr.f32.mxu0 0.0
      %2501 = vmatmul.mubr.f32.gmra.mxu0 %v2327
      %v2502 = vpop.f32.mrf.mxu0
      %v2503 = vadd.f32 0.0, %v2502
      %v2504 = vpop.f32.mrf.mxu0
      %2505 = vmatprep.mubr.f32.mxu0 0.0
      %2506 = vmatmul.mubr.f32.gmra.mxu0 %v2330
      %v2507 = vpop.f32.mrf.mxu0
      %v2508 = vadd.f32 0.0, %v2507
      %v2509 = vpop.f32.mrf.mxu0
      %2510 = vmatprep.mubr.f32.mxu0 0.0
      %2511 = vmatmul.mubr.f32.gmra.mxu0 %v2333
      %v2512 = vpop.f32.mrf.mxu0
      %v2513 = vadd.f32 0.0, %v2512
      %v2514 = vpop.f32.mrf.mxu0
      %2515 = vmatprep.mubr.f32.mxu0 0.0
      %2516 = vmatmul.mubr.f32.gmra.mxu0 %v2336
      %v2517 = vpop.f32.mrf.mxu0
      %v2518 = vadd.f32 0.0, %v2517
      %v2519 = vpop.f32.mrf.mxu0
      %2520 = vmatprep.mubr.f32.mxu0 0.0
      %2521 = vmatmul.mubr.f32.gmra.mxu0 %v2339
      %v2522 = vpop.f32.mrf.mxu0
      %v2523 = vadd.f32 0.0, %v2522
      %v2524 = vpop.f32.mrf.mxu0
      %2525 = vmatprep.mubr.f32.mxu0 0.0
      %2526 = vmatmul.mubr.f32.gmra.mxu0 %v2342
      %v2527 = vpop.f32.mrf.mxu0
      %v2528 = vadd.f32 0.0, %v2527
      %v2529 = vpop.f32.mrf.mxu0
      %2530 = vmatprep.mubr.f32.mxu0 0.0
      %2531 = vmatmul.mubr.f32.gmra.mxu0 %v2345
      %v2532 = vpop.f32.mrf.mxu0
      %v2533 = vadd.f32 0.0, %v2532
      %v2534 = vpop.f32.mrf.mxu0
      %2535 = vmatprep.mubr.f32.mxu0 0.0
      %2536 = vmatmul.mubr.f32.gmra.mxu0 %v2348
      %v2537 = vpop.f32.mrf.mxu0
      %v2538 = vadd.f32 0.0, %v2537
      %v2539 = vpop.f32.mrf.mxu0
      %2540 = vmatprep.mubr.f32.mxu0 0.0
      %2541 = vmatmul.mubr.f32.gmra.mxu0 %v2351
      %v2542 = vpop.f32.mrf.mxu0
      %v2543 = vadd.f32 0.0, %v2542
      %v2544 = vpop.f32.mrf.mxu0
      %2545 = vmatprep.mubr.f32.mxu0 0.0
      %2546 = vmatmul.mubr.f32.gmra.mxu0 %v2354
      %v2547 = vpop.f32.mrf.mxu0
      %v2548 = vadd.f32 0.0, %v2547
      %v2549 = vpop.f32.mrf.mxu0
      %2550 = vmatprep.mubr.f32.mxu0 0.0
      %2551 = vmatmul.mubr.f32.gmra.mxu0 %v2357
      %v2552 = vpop.f32.mrf.mxu0
      %v2553 = vadd.f32 0.0, %v2552
      %v2554 = vpop.f32.mrf.mxu0
      %2555 = vmatprep.mubr.f32.mxu0 0.0
      %2556 = vmatmul.mubr.f32.gmra.mxu0 %v2360
      %v2557 = vpop.f32.mrf.mxu0
      %v2558 = vadd.f32 0.0, %v2557
      %v2559 = vpop.f32.mrf.mxu0
      %2560 = vmatprep.mubr.f32.mxu0 0.0
      %2561 = vmatmul.mubr.f32.gmra.mxu0 %v2363
      %v2562 = vpop.f32.mrf.mxu0
      %v2563 = vadd.f32 0.0, %v2562
      %v2564 = vpop.f32.mrf.mxu0
      %2565 = vmatprep.mubr.f32.mxu0 0.0
      %2566 = vmatmul.mubr.f32.gmra.mxu0 %v2366
      %v2567 = vpop.f32.mrf.mxu0
      %v2568 = vadd.f32 0.0, %v2567
      %v2569 = vpop.f32.mrf.mxu0
      %2570 = vmatprep.mubr.f32.mxu0 0.0
      %2571 = vmatmul.mubr.f32.gmra.mxu0 %v2369
      %v2572 = vpop.f32.mrf.mxu0
      %v2573 = vadd.f32 0.0, %v2572
      %v2574 = vpop.f32.mrf.mxu0
      %2575 = vmatprep.mubr.f32.mxu0 0.0
      %2576 = vmatmul.mubr.f32.gmra.mxu0 %v2372
      %v2577 = vpop.f32.mrf.mxu0
      %v2578 = vadd.f32 0.0, %v2577
      %v2579 = vpop.f32.mrf.mxu0
      %2580 = vmatprep.mubr.f32.mxu0 0.0
      %2581 = vmatmul.mubr.f32.gmra.mxu0 %v2375
      %v2582 = vpop.f32.mrf.mxu0
      %v2583 = vadd.f32 0.0, %v2582
      %v2584 = vpop.f32.mrf.mxu0
      %2585 = vmatprep.mubr.f32.mxu0 0.0
      %2586 = vmatmul.mubr.f32.gmra.mxu0 %v2378
      %v2587 = vpop.f32.mrf.mxu0
      %v2588 = vadd.f32 0.0, %v2587
      %v2589 = vpop.f32.mrf.mxu0
      %2590 = vmatprep.mubr.f32.mxu0 0.0
      %2591 = vmatmul.mubr.f32.gmra.mxu0 %v2381
      %v2592 = vpop.f32.mrf.mxu0
      %v2593 = vadd.f32 0.0, %v2592
      %v2594 = vpop.f32.mrf.mxu0
      %2595 = vmatprep.mubr.f32.mxu0 0.0
      %2596 = vmatmul.mubr.f32.gmra.mxu0 %v2384
      %v2597 = vpop.f32.mrf.mxu0
      %v2598 = vadd.f32 0.0, %v2597
      %v2599 = vpop.f32.mrf.mxu0
      %2600 = vmatprep.mubr.f32.mxu0 0.0
      %2601 = vmatmul.mubr.f32.gmra.mxu0 %v2387
      %v2602 = vpop.f32.mrf.mxu0
      %v2603 = vadd.f32 0.0, %v2602
      %v2604 = vpop.f32.mrf.mxu0
      %2605 = vmatprep.mubr.f32.mxu0 0.0
      %2606 = vmatmul.mubr.f32.gmra.mxu0 %v2390
      %v2607 = vpop.f32.mrf.mxu0
      %v2608 = vadd.f32 0.0, %v2607
      %v2609 = vpop.f32.mrf.mxu0
      %2610 = vmatprep.mubr.f32.mxu0 0.0
      %2611 = vmatmul.mubr.f32.gmra.mxu0 %v2393
      %v2612 = vpop.f32.mrf.mxu0
      %v2613 = vadd.f32 0.0, %v2612
      %v2614 = vpop.f32.mrf.mxu0
      %2615 = vmatprep.mubr.f32.mxu0 0.0
      %2616 = vmatmul.mubr.f32.gmra.mxu0 %v2396
      %v2617 = vpop.f32.mrf.mxu0
      %v2618 = vadd.f32 0.0, %v2617
      %v2619 = vpop.f32.mrf.mxu0
      %2620 = vmatprep.mubr.f32.mxu0 0.0
      %2621 = vmatmul.mubr.f32.gmra.mxu0 %v2399
      %v2622 = vpop.f32.mrf.mxu0
      %v2623 = vadd.f32 0.0, %v2622
      %v2624 = vpop.f32.mrf.mxu0
      %2625 = vdwg.mxu0
      %vm2626 = vcmask 64512
      %2627 = vst.msk [vmem:[%s280] sm:$0xff] %vm2626, %v2468
      %2628 = vst.msk [vmem:[%s280 + $0x8] sm:$0xff] %vm2626, %v2473
      %2629 = vst.msk [vmem:[%s280 + $0x10] sm:$0xff] %vm2626, %v2478
      %2630 = vst.msk [vmem:[%s280 + $0x18] sm:$0xff] %vm2626, %v2483
      %2631 = vst.msk [vmem:[%s280 + $0x20] sm:$0xff] %vm2626, %v2488
      %2632 = vst.msk [vmem:[%s280 + $0x28] sm:$0xff] %vm2626, %v2493
      %2633 = vst.msk [vmem:[%s280 + $0x30] sm:$0xff] %vm2626, %v2498
      %2634 = vst.msk [vmem:[%s280 + $0x38] sm:$0xff] %vm2626, %v2503
      %2635 = vst.msk [vmem:[%s280 + $0x40] sm:$0xff] %vm2626, %v2508
      %2636 = vst.msk [vmem:[%s280 + $0x48] sm:$0xff] %vm2626, %v2513
      %2637 = vst.msk [vmem:[%s280 + $0x50] sm:$0xff] %vm2626, %v2518
      %2638 = vst.msk [vmem:[%s280 + $0x58] sm:$0xff] %vm2626, %v2523
      %2639 = vst.msk [vmem:[%s280 + $0x60] sm:$0xff] %vm2626, %v2528
      %2640 = vst.msk [vmem:[%s280 + $0x68] sm:$0xff] %vm2626, %v2533
      %2641 = vst.msk [vmem:[%s280 + $0x70] sm:$0xff] %vm2626, %v2538
      %2642 = vst.msk [vmem:[%s280 + $0x78] sm:$0xff] %vm2626, %v2543
      %2643 = vst.msk [vmem:[%s280 + $0x80] sm:$0xff] %vm2626, %v2548
      %2644 = vst.msk [vmem:[%s280 + $0x88] sm:$0xff] %vm2626, %v2553
      %2645 = vst.msk [vmem:[%s280 + $0x90] sm:$0xff] %vm2626, %v2558
      %2646 = vst.msk [vmem:[%s280 + $0x98] sm:$0xff] %vm2626, %v2563
      %2647 = vst.msk [vmem:[%s280 + $0xa0] sm:$0xff] %vm2626, %v2568
      %2648 = vst.msk [vmem:[%s280 + $0xa8] sm:$0xff] %vm2626, %v2573
      %2649 = vst.msk [vmem:[%s280 + $0xb0] sm:$0xff] %vm2626, %v2578
      %2650 = vst.msk [vmem:[%s280 + $0xb8] sm:$0xff] %vm2626, %v2583
      %2651 = vst.msk [vmem:[%s280 + $0xc0] sm:$0xff] %vm2626, %v2588
      %2652 = vst.msk [vmem:[%s280 + $0xc8] sm:$0xff] %vm2626, %v2593
      %2653 = vst.msk [vmem:[%s280 + $0xd0] sm:$0xff] %vm2626, %v2598
      %2654 = vst.msk [vmem:[%s280 + $0xd8] sm:$0xff] %vm2626, %v2603
      %2655 = vst.msk [vmem:[%s280 + $0xe0] sm:$0xff] %vm2626, %v2608
      %2656 = vst.msk [vmem:[%s280 + $0xe8] sm:$0xff] %vm2626, %v2613
      %2657 = vst.msk [vmem:[%s280 + $0xf0] sm:$0xff] %vm2626, %v2618
      %2658 = vst.msk [vmem:[%s280 + $0xf8] sm:$0xff] %vm2626, %v2623
      %s2659 = smul.u32 32, %s18
      %p2660 = scmp.lt.s32.totalorder %s2659, 63
      %s2661 = scalar_select %p2660, %s2659, 63
      %s2662 = smul.addr %s2661, 8
      %s2663 = scalar_lea.vmem %s7, %s2662
      // Predicated region
      $region49: #{moe_forward.1} parent=47 // pred_check
        %p2664 = pneg %p188
      $region50: #{moe_forward.1} parent=47 // pred_check_branch
        %2666 = sbr.rel (%p2664) target = $region52
      $region51: #{moe_forward.1} parent=47 // pred_region
        %s2667 = smul.u32 32, %s18
      $region52: #{moe_forward.1} parent=47 // pred_fallthru
        _
    $region48: #{moe_forward.1} parent=5 // pred_fallthru
      _
    %p2668 = scmp.le.s32.totalorder 2, %s13
    // Predicated region
    $region53: #{moe_forward.1} parent=5 // pred_check
      %p2669 = pneg %p2668
    $region54: #{moe_forward.1} parent=5 // pred_check_branch
      %2671 = sbr.rel (%p2669) target = $region56
    $region55: #{moe_forward.1} parent=5 // pred_region
      %s2672 = ssub.s32 %s13, 2
      // Predicated region
      $region57: #{moe_forward.1} parent=55 // pred_check
        %p2673 = pneg %p194
      $region58: #{moe_forward.1} parent=55 // pred_check_branch
        %2675 = sbr.rel (%p2673) target = $region60
      $region59: #{moe_forward.1} parent=55 // pred_region
        %s2676 = smul.u32 32, %s19
        %p2677 = scmp.lt.s32.totalorder %s2676, 63
        %s2678 = scalar_select %p2677, %s2676, 63
        %s2679 = smul.addr %s2678, 8
        %s2680 = scalar_lea.vmem %s7, %s2679
      $region60: #{moe_forward.1} parent=55 // pred_fallthru
        _
    $region56: #{moe_forward.1} parent=5 // pred_fallthru
      _
  $region6: #{moe_forward.1} parent=0 // loop_footer
    %s17 = sadd.s32 1, %s13
  $region7: #{moe_forward.1} parent=0 // loop_footer_branch
    %12 = sbr.rel target = $region3
  $region8: #{moe_forward.1} parent=0 // loop_exit
    _

</llo_original>
